<compile_context>
chip_gen: v7x
topology: tpu7x:2x2x1
jax: 0.10.0
libtpu: 0.0.40
codegen_flags: <defaults>
</compile_context>

<pallas_src>
import functools

import jax
import jax.numpy as jnp
import numpy as np
from jax.experimental import pallas as pl
from jax.experimental.pallas import tpu as pltpu

LEAK = 0.1            # nn.LeakyReLU(0.1)
PRED_SEQLEN = 8       # args['pred_seqlen']
EMB_DIM = 64          # inupt_emb out_features / encoder input_size
ENC_H = 64            # encoder_lstm hidden_size
DEC_H = 128           # decoder_lstm hidden_size
IN_FEAT = 6           # inupt_emb in_features
OUT_FEAT = 2          # decoder_output out_features


def _vmem_block_spec():
    ms = getattr(pltpu, "MemorySpace", None) or getattr(pltpu, "TPUMemorySpace", None)
    if ms is not None:
        return pl.BlockSpec(memory_space=ms.VMEM)
    return pl.BlockSpec()


# ---------------------------------------------------------------------------
# Single fused kernel: embedding -> encoder LSTM -> decoder LSTM -> head
# ---------------------------------------------------------------------------
def fused_forward_kernel(hist_ref, res_ref,
                         emb_w_ref, emb_b_ref,
                         enc_wih_ref, enc_whh_ref, enc_b_ref,
                         dec_wih_ref, dec_whh_ref, dec_b_ref,
                         out_w_ref, o_ref, *, batch, t_seq, pred):
    B, T, P = batch, t_seq, pred
    HE = enc_whh_ref.shape[0]          # 64  (encoder hidden, unpadded)
    HD = dec_whh_ref.shape[0]          # 128 (decoder hidden)
    f32, bf16 = jnp.float32, jnp.bfloat16

    # ---- (1) encoder input path hoisted across all T steps (2 batched matmuls)
    emb = (jnp.dot(hist_ref[...].astype(bf16), emb_w_ref[...],
                   preferred_element_type=f32) + emb_b_ref[...])          # (T*B, 64)
    emb = jnp.maximum(emb, LEAK * emb)                                    # LeakyReLU
    x_proj_all = (jnp.dot(emb.astype(bf16), enc_wih_ref[...],
                          preferred_element_type=f32) + enc_b_ref[...])   # (T*B, 4*HE)

    # ---- (2) encoder recurrence (unrolled): only h @ W_hh is on the serial path
    h = jnp.zeros((B, HE), f32)
    c = jnp.zeros((B, HE), f32)
    for t in range(T):
        gates = (x_proj_all[t * B:(t + 1) * B]
                 + jnp.dot(h.astype(bf16), enc_whh_ref[...],
                           preferred_element_type=f32))                   # (B, 4*HE)
        sig = jax.nn.sigmoid(gates[:, :3 * HE])        # gates ordered [i | f | o | g]
        g = jnp.tanh(gates[:, 3 * HE:])
        i, f, o = sig[:, :HE], sig[:, HE:2 * HE], sig[:, 2 * HE:]
        c = f * c + i * g
        h = o * jnp.tanh(c)

    # ---- (3) decoder: input is the constant encoder hidden state, so its input
    #      projection (+ fused bias) is hoisted out of the time loop
    x_proj = (jnp.dot(h.astype(bf16), dec_wih_ref[...],
                      preferred_element_type=f32) + dec_b_ref[...])       # (B, 4*HD)

    hd = jnp.zeros((B, HD), f32)
    cd = jnp.zeros((B, HD), f32)
    hd_steps = []
    for _ in range(P):
        gates = x_proj + jnp.dot(hd.astype(bf16), dec_whh_ref[...],
                                 preferred_element_type=f32)              # (B, 4*HD)
        sig = jax.nn.sigmoid(gates[:, :3 * HD])
        g = jnp.tanh(gates[:, 3 * HD:])
        i, f, o = sig[:, :HD], sig[:, HD:2 * HD], sig[:, 2 * HD:]
        cd = f * cd + i * g
        hd = o * jnp.tanh(cd)
        hd_steps.append(hd)

    # ---- (4) output head hoisted out of the loop: one matmul + one store.
    hs = jnp.concatenate(hd_steps, axis=0)                                # (P*B, HD)
    act = jnp.maximum(hs, LEAK * hs)
    y = jnp.dot(act.astype(bf16), out_w_ref[...], preferred_element_type=f32)
    o_ref[...] = y + res_ref[...]          # residual (last pose + out bias), tiled


# ---------------------------------------------------------------------------
# Forward wrapper
# ---------------------------------------------------------------------------
@functools.partial(jax.jit, static_argnames=("pred_seqlen",))
def vlstm_f_forward(pose_tags, hist_tags, pose_nghs, hist_nghs, params, pred_seqlen):
    # pose_nghs / hist_nghs are unused by the reference forward (signature parity)
    del pose_nghs, hist_nghs
    B, T, _ = hist_tags.shape
    hist_flat = (jnp.transpose(hist_tags, (1, 0, 2))
                 .astype(jnp.float32).reshape(T * B, IN_FEAT))            # (T*B, 6)
    # last pose + output bias, tiled time-major to (P*B, 2) (tiny; prepared in XLA)
    res = pose_tags[:, -1, :].astype(jnp.float32) + params["out_bias"][None, :]
    res_full = jnp.tile(res, (pred_seqlen, 1))                            # (P*B, 2)

    vmem = _vmem_block_spec()
    kernel = functools.partial(fused_forward_kernel,
                               batch=B, t_seq=T, pred=pred_seqlen)
    out_flat = pl.pallas_call(
        kernel,
        out_shape=jax.ShapeDtypeStruct((pred_seqlen * B, OUT_FEAT), jnp.float32),
        in_specs=[vmem] * 11,
        out_specs=vmem,
    )(hist_flat, res_full,
      params["emb_w_t"], params["emb_b_row"],
      params["enc_wih_r"], params["enc_whh_r"], params["enc_b_r"],
      params["dec_wih_r"], params["dec_whh_r"], params["dec_b_r"],
      params["out_w_t"])
    out = out_flat.reshape(pred_seqlen, B, OUT_FEAT)                      # time-major
    return jnp.transpose(out, (1, 0, 2))                                  # (B, P, 2)


# ---------------------------------------------------------------------------
# Pure-JAX reference (mirrors the PyTorch module exactly) for validation
# ---------------------------------------------------------------------------
def _leaky_relu_ref(x):
    return jnp.where(x > 0, x, LEAK * x)


def _lstm_ref(x, wih, whh, bih, bhh):
    B, T, _ = x.shape
    H = whh.shape[1]
    h = jnp.zeros((B, H), jnp.float32)
    c = jnp.zeros((B, H), jnp.float32)
    outs = []
    for t in range(T):
        gates = x[:, t] @ wih.T + bih + h @ whh.T + bhh
        i = jax.nn.sigmoid(gates[:, :H])
        f = jax.nn.sigmoid(gates[:, H:2 * H])
        g = jnp.tanh(gates[:, 2 * H:3 * H])
        o = jax.nn.sigmoid(gates[:, 3 * H:])
        c = f * c + i * g
        h = o * jnp.tanh(c)
        outs.append(h)
    return jnp.stack(outs, axis=1), h


def forward_ref(pose_tags, hist_tags, params, pred_seqlen):
    emb = _leaky_relu_ref(hist_tags @ params["emb_W"].T + params["emb_bias"])
    _, enc_h = _lstm_ref(emb, params["enc_wih"], params["enc_whh"],
                         params["enc_bih"], params["enc_bhh"])
    dec_inp = jnp.repeat(enc_h[:, None, :], pred_seqlen, axis=1)
    dec_out, _ = _lstm_ref(dec_inp, params["dec_wih"], params["dec_whh"],
                           params["dec_bih"], params["dec_bhh"])
    head = _leaky_relu_ref(dec_out) @ params["out_W"].T + params["out_bias"]
    return pose_tags[:, -1:, :] + head


# ---------------------------------------------------------------------------
# Parameter init (PyTorch shapes) + kernel-friendly transposed/reordered forms
# ---------------------------------------------------------------------------
def _reorder_ifgo_to_ifog(w_t, h):
    """Columns ordered [i|f|g|o] (PyTorch LSTM layout) -> [i|f|o|g]."""
    return jnp.concatenate(
        [w_t[:, :2 * h], w_t[:, 3 * h:4 * h], w_t[:, 2 * h:3 * h]], axis=1)


def init_params(key):
    ks = jax.random.split(key, 10)
    s = 0.1
    p = {}
    p["emb_W"] = s * jax.random.normal(ks[0], (EMB_DIM, IN_FEAT), jnp.float32)
    p["emb_bias"] = s * jax.random.normal(ks[1], (EMB_DIM,), jnp.float32)
    p["enc_wih"] = s * jax.random.normal(ks[2], (4 * ENC_H, EMB_DIM), jnp.float32)
    p["enc_whh"] = s * jax.random.normal(ks[3], (4 * ENC_H, ENC_H), jnp.float32)
    p["enc_bih"] = s * jax.random.normal(ks[4], (4 * ENC_H,), jnp.float32)
    p["enc_bhh"] = s * jax.random.normal(ks[5], (4 * ENC_H,), jnp.float32)
    p["dec_wih"] = s * jax.random.normal(ks[6], (4 * DEC_H, ENC_H), jnp.float32)
    p["dec_whh"] = s * jax.random.normal(ks[7], (4 * DEC_H, DEC_H), jnp.float32)
    p["dec_bih"] = s * jax.random.normal(ks[8], (4 * DEC_H,), jnp.float32)
    p["dec_bhh"] = s * jax.random.normal(ks[9], (4 * DEC_H,), jnp.float32)
    k2 = jax.random.split(ks[0], 2)
    p["out_W"] = s * jax.random.normal(k2[0], (OUT_FEAT, DEC_H), jnp.float32)
    p["out_bias"] = s * jax.random.normal(k2[1], (OUT_FEAT,), jnp.float32)

    # ---- kernel-friendly forms: transposed, gate order [i|f|o|g], bf16 weights,
    #      fused (b_ih + b_hh) bias rows kept in f32 ----
    bf16 = jnp.bfloat16
    p["emb_w_t"] = p["emb_W"].T.astype(bf16)                               # (6, 64)
    p["emb_b_row"] = p["emb_bias"][None, :]                                # (1, 64)

    p["enc_wih_r"] = _reorder_ifgo_to_ifog(p["enc_wih"].T, ENC_H).astype(bf16)   # (64, 256)
    p["enc_whh_r"] = _reorder_ifgo_to_ifog(p["enc_whh"].T, ENC_H).astype(bf16)   # (64, 256)
    p["enc_b_r"] = _reorder_ifgo_to_ifog(
        (p["enc_bih"] + p["enc_bhh"])[None, :], ENC_H)                     # (1, 256)

    p["dec_wih_r"] = _reorder_ifgo_to_ifog(p["dec_wih"].T, DEC_H).astype(bf16)   # (64, 512)
    p["dec_whh_r"] = _reorder_ifgo_to_ifog(p["dec_whh"].T, DEC_H).astype(bf16)   # (128, 512)
    p["dec_b_r"] = _reorder_ifgo_to_ifog(
        (p["dec_bih"] + p["dec_bhh"])[None, :], DEC_H)                     # (1, 512)

    p["out_w_t"] = p["out_W"].T.astype(bf16)                               # (128, 2)
    return p


if __name__ == "__main__":
    key = jax.random.PRNGKey(0)
    kp, k1, k2, k3, k4 = jax.random.split(key, 5)
    params = init_params(kp)

    B, T, N_NGH = 2, 8, 3
    pose_tags = jax.random.normal(k1, (B, T, OUT_FEAT), jnp.float32)
    hist_tags = jax.random.normal(k2, (B, T, IN_FEAT), jnp.float32)
    pose_nghs = jax.random.normal(k3, (B, T, N_NGH, OUT_FEAT), jnp.float32)  # unused
    hist_nghs = jax.random.normal(k4, (B, T, N_NGH, IN_FEAT), jnp.float32)   # unused

    out = vlstm_f_forward(pose_tags, hist_tags, pose_nghs, hist_nghs, params,
                          PRED_SEQLEN)
    out = jax.block_until_ready(out)

    ref = forward_ref(pose_tags, hist_tags, params, PRED_SEQLEN)
    # bf16 matmul operands (f32 accumulation / f32 state) -> looser tolerance
    np.testing.assert_allclose(np.asarray(out), np.asarray(ref), rtol=3e-2, atol=3e-2)
    assert out.shape == (B, PRED_SEQLEN, OUT_FEAT)
    print("KERNEL_OK")
</pallas_src>

<mosaic_0001>
module attributes {stable_mosaic.version = 11 : i64} {
  func.func @fused_forward_kernel(%arg0: memref<16x6xf32, #tpu.memory_space<vmem>>, %arg1: memref<16x2xf32, #tpu.memory_space<vmem>>, %arg2: memref<6x64xbf16, #tpu.memory_space<vmem>>, %arg3: memref<1x64xf32, #tpu.memory_space<vmem>>, %arg4: memref<64x256xbf16, #tpu.memory_space<vmem>>, %arg5: memref<64x256xbf16, #tpu.memory_space<vmem>>, %arg6: memref<1x256xf32, #tpu.memory_space<vmem>>, %arg7: memref<64x512xbf16, #tpu.memory_space<vmem>>, %arg8: memref<128x512xbf16, #tpu.memory_space<vmem>>, %arg9: memref<1x512xf32, #tpu.memory_space<vmem>>, %arg10: memref<128x2xbf16, #tpu.memory_space<vmem>>, %arg11: memref<16x2xf32, #tpu.memory_space<vmem>>) attributes {dimension_semantics = [], scalar_prefetch = 0 : i64, scratch_operands = 0 : i64, tpu.core_type = #tpu.core_type<tc>} {
    %c0 = arith.constant 0 : index
    %c0_0 = arith.constant 0 : index
    %0 = vector.load %arg0[%c0, %c0_0] : memref<16x6xf32, #tpu.memory_space<vmem>>, vector<16x6xf32>
    %1 = arith.truncf %0 : vector<16x6xf32> to vector<16x6xbf16>
    %c0_1 = arith.constant 0 : index
    %c0_2 = arith.constant 0 : index
    %2 = vector.load %arg2[%c0_1, %c0_2] : memref<6x64xbf16, #tpu.memory_space<vmem>>, vector<6x64xbf16>
    %cst = arith.constant dense<0.000000e+00> : vector<16x64xf32>
    %3 = tpu.matmul %1, %2, %cst {dimension_numbers = #tpu.dot_dimension_numbers<[1], [0], [0], [1], [0, 0, 1, 1], [], []>} : vector<16x6xbf16>, vector<6x64xbf16>, vector<16x64xf32> -> vector<16x64xf32>
    %c0_3 = arith.constant 0 : index
    %c0_4 = arith.constant 0 : index
    %4 = vector.load %arg3[%c0_3, %c0_4] : memref<1x64xf32, #tpu.memory_space<vmem>>, vector<1x64xf32>
    %5 = vector.broadcast %4 : vector<1x64xf32> to vector<16x64xf32>
    %6 = arith.addf %3, %5 : vector<16x64xf32>
    %cst_5 = arith.constant 1.000000e-01 : f32
    %7 = vector.broadcast %cst_5 : f32 to vector<16x64xf32>
    %8 = arith.mulf %7, %6 : vector<16x64xf32>
    %9 = arith.maximumf %6, %8 : vector<16x64xf32>
    %10 = arith.truncf %9 : vector<16x64xf32> to vector<16x64xbf16>
    %c0_6 = arith.constant 0 : index
    %c0_7 = arith.constant 0 : index
    %11 = vector.load %arg4[%c0_6, %c0_7] : memref<64x256xbf16, #tpu.memory_space<vmem>>, vector<64x256xbf16>
    %cst_8 = arith.constant dense<0.000000e+00> : vector<16x256xf32>
    %12 = tpu.matmul %10, %11, %cst_8 {dimension_numbers = #tpu.dot_dimension_numbers<[1], [0], [0], [1], [0, 0, 1, 1], [], []>} : vector<16x64xbf16>, vector<64x256xbf16>, vector<16x256xf32> -> vector<16x256xf32>
    %c0_9 = arith.constant 0 : index
    %c0_10 = arith.constant 0 : index
    %13 = vector.load %arg6[%c0_9, %c0_10] : memref<1x256xf32, #tpu.memory_space<vmem>>, vector<1x256xf32>
    %14 = vector.broadcast %13 : vector<1x256xf32> to vector<16x256xf32>
    %15 = arith.addf %12, %14 : vector<16x256xf32>
    %cst_11 = arith.constant 0.000000e+00 : f32
    %16 = vector.broadcast %cst_11 : f32 to vector<2x64xf32>
    %cst_12 = arith.constant 0.000000e+00 : f32
    %17 = vector.broadcast %cst_12 : f32 to vector<2x64xf32>
    %18 = vector.extract_strided_slice %15 {offsets = [0, 0], sizes = [2, 256], strides = [1, 1]} : vector<16x256xf32> to vector<2x256xf32>
    %19 = arith.truncf %16 : vector<2x64xf32> to vector<2x64xbf16>
    %c0_13 = arith.constant 0 : index
    %c0_14 = arith.constant 0 : index
    %20 = vector.load %arg5[%c0_13, %c0_14] : memref<64x256xbf16, #tpu.memory_space<vmem>>, vector<64x256xbf16>
    %cst_15 = arith.constant dense<0.000000e+00> : vector<2x256xf32>
    %21 = tpu.matmul %19, %20, %cst_15 {dimension_numbers = #tpu.dot_dimension_numbers<[1], [0], [0], [1], [0, 0, 1, 1], [], []>} : vector<2x64xbf16>, vector<64x256xbf16>, vector<2x256xf32> -> vector<2x256xf32>
    %22 = arith.addf %18, %21 : vector<2x256xf32>
    %23 = vector.extract_strided_slice %22 {offsets = [0, 0], sizes = [2, 192], strides = [1, 1]} : vector<2x256xf32> to vector<2x192xf32>
    %24 = arith.negf %23 : vector<2x192xf32>
    %25 = math.exp %24 : vector<2x192xf32>
    %cst_16 = arith.constant 1.000000e+00 : f32
    %26 = vector.broadcast %cst_16 : f32 to vector<2x192xf32>
    %27 = arith.addf %26, %25 : vector<2x192xf32>
    %28 = arith.divf %26, %27 : vector<2x192xf32>
    %29 = vector.extract_strided_slice %22 {offsets = [0, 192], sizes = [2, 64], strides = [1, 1]} : vector<2x256xf32> to vector<2x64xf32>
    %30 = math.tanh %29 : vector<2x64xf32>
    %31 = vector.extract_strided_slice %28 {offsets = [0, 0], sizes = [2, 64], strides = [1, 1]} : vector<2x192xf32> to vector<2x64xf32>
    %32 = vector.extract_strided_slice %28 {offsets = [0, 64], sizes = [2, 64], strides = [1, 1]} : vector<2x192xf32> to vector<2x64xf32>
    %33 = vector.extract_strided_slice %28 {offsets = [0, 128], sizes = [2, 64], strides = [1, 1]} : vector<2x192xf32> to vector<2x64xf32>
    %34 = arith.mulf %32, %17 : vector<2x64xf32>
    %35 = arith.mulf %31, %30 : vector<2x64xf32>
    %36 = arith.addf %34, %35 : vector<2x64xf32>
    %37 = math.tanh %36 : vector<2x64xf32>
    %38 = arith.mulf %33, %37 : vector<2x64xf32>
    %39 = vector.extract_strided_slice %15 {offsets = [2, 0], sizes = [2, 256], strides = [1, 1]} : vector<16x256xf32> to vector<2x256xf32>
    %40 = arith.truncf %38 : vector<2x64xf32> to vector<2x64xbf16>
    %c0_17 = arith.constant 0 : index
    %c0_18 = arith.constant 0 : index
    %41 = vector.load %arg5[%c0_17, %c0_18] : memref<64x256xbf16, #tpu.memory_space<vmem>>, vector<64x256xbf16>
    %cst_19 = arith.constant dense<0.000000e+00> : vector<2x256xf32>
    %42 = tpu.matmul %40, %41, %cst_19 {dimension_numbers = #tpu.dot_dimension_numbers<[1], [0], [0], [1], [0, 0, 1, 1], [], []>} : vector<2x64xbf16>, vector<64x256xbf16>, vector<2x256xf32> -> vector<2x256xf32>
    %43 = arith.addf %39, %42 : vector<2x256xf32>
    %44 = vector.extract_strided_slice %43 {offsets = [0, 0], sizes = [2, 192], strides = [1, 1]} : vector<2x256xf32> to vector<2x192xf32>
    %45 = arith.negf %44 : vector<2x192xf32>
    %46 = math.exp %45 : vector<2x192xf32>
    %cst_20 = arith.constant 1.000000e+00 : f32
    %47 = vector.broadcast %cst_20 : f32 to vector<2x192xf32>
    %48 = arith.addf %47, %46 : vector<2x192xf32>
    %49 = arith.divf %47, %48 : vector<2x192xf32>
    %50 = vector.extract_strided_slice %43 {offsets = [0, 192], sizes = [2, 64], strides = [1, 1]} : vector<2x256xf32> to vector<2x64xf32>
    %51 = math.tanh %50 : vector<2x64xf32>
    %52 = vector.extract_strided_slice %49 {offsets = [0, 0], sizes = [2, 64], strides = [1, 1]} : vector<2x192xf32> to vector<2x64xf32>
    %53 = vector.extract_strided_slice %49 {offsets = [0, 64], sizes = [2, 64], strides = [1, 1]} : vector<2x192xf32> to vector<2x64xf32>
    %54 = vector.extract_strided_slice %49 {offsets = [0, 128], sizes = [2, 64], strides = [1, 1]} : vector<2x192xf32> to vector<2x64xf32>
    %55 = arith.mulf %53, %36 : vector<2x64xf32>
    %56 = arith.mulf %52, %51 : vector<2x64xf32>
    %57 = arith.addf %55, %56 : vector<2x64xf32>
    %58 = math.tanh %57 : vector<2x64xf32>
    %59 = arith.mulf %54, %58 : vector<2x64xf32>
    %60 = vector.extract_strided_slice %15 {offsets = [4, 0], sizes = [2, 256], strides = [1, 1]} : vector<16x256xf32> to vector<2x256xf32>
    %61 = arith.truncf %59 : vector<2x64xf32> to vector<2x64xbf16>
    %c0_21 = arith.constant 0 : index
    %c0_22 = arith.constant 0 : index
    %62 = vector.load %arg5[%c0_21, %c0_22] : memref<64x256xbf16, #tpu.memory_space<vmem>>, vector<64x256xbf16>
    %cst_23 = arith.constant dense<0.000000e+00> : vector<2x256xf32>
    %63 = tpu.matmul %61, %62, %cst_23 {dimension_numbers = #tpu.dot_dimension_numbers<[1], [0], [0], [1], [0, 0, 1, 1], [], []>} : vector<2x64xbf16>, vector<64x256xbf16>, vector<2x256xf32> -> vector<2x256xf32>
    %64 = arith.addf %60, %63 : vector<2x256xf32>
    %65 = vector.extract_strided_slice %64 {offsets = [0, 0], sizes = [2, 192], strides = [1, 1]} : vector<2x256xf32> to vector<2x192xf32>
    %66 = arith.negf %65 : vector<2x192xf32>
    %67 = math.exp %66 : vector<2x192xf32>
    %cst_24 = arith.constant 1.000000e+00 : f32
    %68 = vector.broadcast %cst_24 : f32 to vector<2x192xf32>
    %69 = arith.addf %68, %67 : vector<2x192xf32>
    %70 = arith.divf %68, %69 : vector<2x192xf32>
    %71 = vector.extract_strided_slice %64 {offsets = [0, 192], sizes = [2, 64], strides = [1, 1]} : vector<2x256xf32> to vector<2x64xf32>
    %72 = math.tanh %71 : vector<2x64xf32>
    %73 = vector.extract_strided_slice %70 {offsets = [0, 0], sizes = [2, 64], strides = [1, 1]} : vector<2x192xf32> to vector<2x64xf32>
    %74 = vector.extract_strided_slice %70 {offsets = [0, 64], sizes = [2, 64], strides = [1, 1]} : vector<2x192xf32> to vector<2x64xf32>
    %75 = vector.extract_strided_slice %70 {offsets = [0, 128], sizes = [2, 64], strides = [1, 1]} : vector<2x192xf32> to vector<2x64xf32>
    %76 = arith.mulf %74, %57 : vector<2x64xf32>
    %77 = arith.mulf %73, %72 : vector<2x64xf32>
    %78 = arith.addf %76, %77 : vector<2x64xf32>
    %79 = math.tanh %78 : vector<2x64xf32>
    %80 = arith.mulf %75, %79 : vector<2x64xf32>
    %81 = vector.extract_strided_slice %15 {offsets = [6, 0], sizes = [2, 256], strides = [1, 1]} : vector<16x256xf32> to vector<2x256xf32>
    %82 = arith.truncf %80 : vector<2x64xf32> to vector<2x64xbf16>
    %c0_25 = arith.constant 0 : index
    %c0_26 = arith.constant 0 : index
    %83 = vector.load %arg5[%c0_25, %c0_26] : memref<64x256xbf16, #tpu.memory_space<vmem>>, vector<64x256xbf16>
    %cst_27 = arith.constant dense<0.000000e+00> : vector<2x256xf32>
    %84 = tpu.matmul %82, %83, %cst_27 {dimension_numbers = #tpu.dot_dimension_numbers<[1], [0], [0], [1], [0, 0, 1, 1], [], []>} : vector<2x64xbf16>, vector<64x256xbf16>, vector<2x256xf32> -> vector<2x256xf32>
    %85 = arith.addf %81, %84 : vector<2x256xf32>
    %86 = vector.extract_strided_slice %85 {offsets = [0, 0], sizes = [2, 192], strides = [1, 1]} : vector<2x256xf32> to vector<2x192xf32>
    %87 = arith.negf %86 : vector<2x192xf32>
    %88 = math.exp %87 : vector<2x192xf32>
    %cst_28 = arith.constant 1.000000e+00 : f32
    %89 = vector.broadcast %cst_28 : f32 to vector<2x192xf32>
    %90 = arith.addf %89, %88 : vector<2x192xf32>
    %91 = arith.divf %89, %90 : vector<2x192xf32>
    %92 = vector.extract_strided_slice %85 {offsets = [0, 192], sizes = [2, 64], strides = [1, 1]} : vector<2x256xf32> to vector<2x64xf32>
    %93 = math.tanh %92 : vector<2x64xf32>
    %94 = vector.extract_strided_slice %91 {offsets = [0, 0], sizes = [2, 64], strides = [1, 1]} : vector<2x192xf32> to vector<2x64xf32>
    %95 = vector.extract_strided_slice %91 {offsets = [0, 64], sizes = [2, 64], strides = [1, 1]} : vector<2x192xf32> to vector<2x64xf32>
    %96 = vector.extract_strided_slice %91 {offsets = [0, 128], sizes = [2, 64], strides = [1, 1]} : vector<2x192xf32> to vector<2x64xf32>
    %97 = arith.mulf %95, %78 : vector<2x64xf32>
    %98 = arith.mulf %94, %93 : vector<2x64xf32>
    %99 = arith.addf %97, %98 : vector<2x64xf32>
    %100 = math.tanh %99 : vector<2x64xf32>
    %101 = arith.mulf %96, %100 : vector<2x64xf32>
    %102 = vector.extract_strided_slice %15 {offsets = [8, 0], sizes = [2, 256], strides = [1, 1]} : vector<16x256xf32> to vector<2x256xf32>
    %103 = arith.truncf %101 : vector<2x64xf32> to vector<2x64xbf16>
    %c0_29 = arith.constant 0 : index
    %c0_30 = arith.constant 0 : index
    %104 = vector.load %arg5[%c0_29, %c0_30] : memref<64x256xbf16, #tpu.memory_space<vmem>>, vector<64x256xbf16>
    %cst_31 = arith.constant dense<0.000000e+00> : vector<2x256xf32>
    %105 = tpu.matmul %103, %104, %cst_31 {dimension_numbers = #tpu.dot_dimension_numbers<[1], [0], [0], [1], [0, 0, 1, 1], [], []>} : vector<2x64xbf16>, vector<64x256xbf16>, vector<2x256xf32> -> vector<2x256xf32>
    %106 = arith.addf %102, %105 : vector<2x256xf32>
    %107 = vector.extract_strided_slice %106 {offsets = [0, 0], sizes = [2, 192], strides = [1, 1]} : vector<2x256xf32> to vector<2x192xf32>
    %108 = arith.negf %107 : vector<2x192xf32>
    %109 = math.exp %108 : vector<2x192xf32>
    %cst_32 = arith.constant 1.000000e+00 : f32
    %110 = vector.broadcast %cst_32 : f32 to vector<2x192xf32>
    %111 = arith.addf %110, %109 : vector<2x192xf32>
    %112 = arith.divf %110, %111 : vector<2x192xf32>
    %113 = vector.extract_strided_slice %106 {offsets = [0, 192], sizes = [2, 64], strides = [1, 1]} : vector<2x256xf32> to vector<2x64xf32>
    %114 = math.tanh %113 : vector<2x64xf32>
    %115 = vector.extract_strided_slice %112 {offsets = [0, 0], sizes = [2, 64], strides = [1, 1]} : vector<2x192xf32> to vector<2x64xf32>
    %116 = vector.extract_strided_slice %112 {offsets = [0, 64], sizes = [2, 64], strides = [1, 1]} : vector<2x192xf32> to vector<2x64xf32>
    %117 = vector.extract_strided_slice %112 {offsets = [0, 128], sizes = [2, 64], strides = [1, 1]} : vector<2x192xf32> to vector<2x64xf32>
    %118 = arith.mulf %116, %99 : vector<2x64xf32>
    %119 = arith.mulf %115, %114 : vector<2x64xf32>
    %120 = arith.addf %118, %119 : vector<2x64xf32>
    %121 = math.tanh %120 : vector<2x64xf32>
    %122 = arith.mulf %117, %121 : vector<2x64xf32>
    %123 = vector.extract_strided_slice %15 {offsets = [10, 0], sizes = [2, 256], strides = [1, 1]} : vector<16x256xf32> to vector<2x256xf32>
    %124 = arith.truncf %122 : vector<2x64xf32> to vector<2x64xbf16>
    %c0_33 = arith.constant 0 : index
    %c0_34 = arith.constant 0 : index
    %125 = vector.load %arg5[%c0_33, %c0_34] : memref<64x256xbf16, #tpu.memory_space<vmem>>, vector<64x256xbf16>
    %cst_35 = arith.constant dense<0.000000e+00> : vector<2x256xf32>
    %126 = tpu.matmul %124, %125, %cst_35 {dimension_numbers = #tpu.dot_dimension_numbers<[1], [0], [0], [1], [0, 0, 1, 1], [], []>} : vector<2x64xbf16>, vector<64x256xbf16>, vector<2x256xf32> -> vector<2x256xf32>
    %127 = arith.addf %123, %126 : vector<2x256xf32>
    %128 = vector.extract_strided_slice %127 {offsets = [0, 0], sizes = [2, 192], strides = [1, 1]} : vector<2x256xf32> to vector<2x192xf32>
    %129 = arith.negf %128 : vector<2x192xf32>
    %130 = math.exp %129 : vector<2x192xf32>
    %cst_36 = arith.constant 1.000000e+00 : f32
    %131 = vector.broadcast %cst_36 : f32 to vector<2x192xf32>
    %132 = arith.addf %131, %130 : vector<2x192xf32>
    %133 = arith.divf %131, %132 : vector<2x192xf32>
    %134 = vector.extract_strided_slice %127 {offsets = [0, 192], sizes = [2, 64], strides = [1, 1]} : vector<2x256xf32> to vector<2x64xf32>
    %135 = math.tanh %134 : vector<2x64xf32>
    %136 = vector.extract_strided_slice %133 {offsets = [0, 0], sizes = [2, 64], strides = [1, 1]} : vector<2x192xf32> to vector<2x64xf32>
    %137 = vector.extract_strided_slice %133 {offsets = [0, 64], sizes = [2, 64], strides = [1, 1]} : vector<2x192xf32> to vector<2x64xf32>
    %138 = vector.extract_strided_slice %133 {offsets = [0, 128], sizes = [2, 64], strides = [1, 1]} : vector<2x192xf32> to vector<2x64xf32>
    %139 = arith.mulf %137, %120 : vector<2x64xf32>
    %140 = arith.mulf %136, %135 : vector<2x64xf32>
    %141 = arith.addf %139, %140 : vector<2x64xf32>
    %142 = math.tanh %141 : vector<2x64xf32>
    %143 = arith.mulf %138, %142 : vector<2x64xf32>
    %144 = vector.extract_strided_slice %15 {offsets = [12, 0], sizes = [2, 256], strides = [1, 1]} : vector<16x256xf32> to vector<2x256xf32>
    %145 = arith.truncf %143 : vector<2x64xf32> to vector<2x64xbf16>
    %c0_37 = arith.constant 0 : index
    %c0_38 = arith.constant 0 : index
    %146 = vector.load %arg5[%c0_37, %c0_38] : memref<64x256xbf16, #tpu.memory_space<vmem>>, vector<64x256xbf16>
    %cst_39 = arith.constant dense<0.000000e+00> : vector<2x256xf32>
    %147 = tpu.matmul %145, %146, %cst_39 {dimension_numbers = #tpu.dot_dimension_numbers<[1], [0], [0], [1], [0, 0, 1, 1], [], []>} : vector<2x64xbf16>, vector<64x256xbf16>, vector<2x256xf32> -> vector<2x256xf32>
    %148 = arith.addf %144, %147 : vector<2x256xf32>
    %149 = vector.extract_strided_slice %148 {offsets = [0, 0], sizes = [2, 192], strides = [1, 1]} : vector<2x256xf32> to vector<2x192xf32>
    %150 = arith.negf %149 : vector<2x192xf32>
    %151 = math.exp %150 : vector<2x192xf32>
    %cst_40 = arith.constant 1.000000e+00 : f32
    %152 = vector.broadcast %cst_40 : f32 to vector<2x192xf32>
    %153 = arith.addf %152, %151 : vector<2x192xf32>
    %154 = arith.divf %152, %153 : vector<2x192xf32>
    %155 = vector.extract_strided_slice %148 {offsets = [0, 192], sizes = [2, 64], strides = [1, 1]} : vector<2x256xf32> to vector<2x64xf32>
    %156 = math.tanh %155 : vector<2x64xf32>
    %157 = vector.extract_strided_slice %154 {offsets = [0, 0], sizes = [2, 64], strides = [1, 1]} : vector<2x192xf32> to vector<2x64xf32>
    %158 = vector.extract_strided_slice %154 {offsets = [0, 64], sizes = [2, 64], strides = [1, 1]} : vector<2x192xf32> to vector<2x64xf32>
    %159 = vector.extract_strided_slice %154 {offsets = [0, 128], sizes = [2, 64], strides = [1, 1]} : vector<2x192xf32> to vector<2x64xf32>
    %160 = arith.mulf %158, %141 : vector<2x64xf32>
    %161 = arith.mulf %157, %156 : vector<2x64xf32>
    %162 = arith.addf %160, %161 : vector<2x64xf32>
    %163 = math.tanh %162 : vector<2x64xf32>
    %164 = arith.mulf %159, %163 : vector<2x64xf32>
    %165 = vector.extract_strided_slice %15 {offsets = [14, 0], sizes = [2, 256], strides = [1, 1]} : vector<16x256xf32> to vector<2x256xf32>
    %166 = arith.truncf %164 : vector<2x64xf32> to vector<2x64xbf16>
    %c0_41 = arith.constant 0 : index
    %c0_42 = arith.constant 0 : index
    %167 = vector.load %arg5[%c0_41, %c0_42] : memref<64x256xbf16, #tpu.memory_space<vmem>>, vector<64x256xbf16>
    %cst_43 = arith.constant dense<0.000000e+00> : vector<2x256xf32>
    %168 = tpu.matmul %166, %167, %cst_43 {dimension_numbers = #tpu.dot_dimension_numbers<[1], [0], [0], [1], [0, 0, 1, 1], [], []>} : vector<2x64xbf16>, vector<64x256xbf16>, vector<2x256xf32> -> vector<2x256xf32>
    %169 = arith.addf %165, %168 : vector<2x256xf32>
    %170 = vector.extract_strided_slice %169 {offsets = [0, 0], sizes = [2, 192], strides = [1, 1]} : vector<2x256xf32> to vector<2x192xf32>
    %171 = arith.negf %170 : vector<2x192xf32>
    %172 = math.exp %171 : vector<2x192xf32>
    %cst_44 = arith.constant 1.000000e+00 : f32
    %173 = vector.broadcast %cst_44 : f32 to vector<2x192xf32>
    %174 = arith.addf %173, %172 : vector<2x192xf32>
    %175 = arith.divf %173, %174 : vector<2x192xf32>
    %176 = vector.extract_strided_slice %169 {offsets = [0, 192], sizes = [2, 64], strides = [1, 1]} : vector<2x256xf32> to vector<2x64xf32>
    %177 = math.tanh %176 : vector<2x64xf32>
    %178 = vector.extract_strided_slice %175 {offsets = [0, 0], sizes = [2, 64], strides = [1, 1]} : vector<2x192xf32> to vector<2x64xf32>
    %179 = vector.extract_strided_slice %175 {offsets = [0, 64], sizes = [2, 64], strides = [1, 1]} : vector<2x192xf32> to vector<2x64xf32>
    %180 = vector.extract_strided_slice %175 {offsets = [0, 128], sizes = [2, 64], strides = [1, 1]} : vector<2x192xf32> to vector<2x64xf32>
    %181 = arith.mulf %179, %162 : vector<2x64xf32>
    %182 = arith.mulf %178, %177 : vector<2x64xf32>
    %183 = arith.addf %181, %182 : vector<2x64xf32>
    %184 = math.tanh %183 : vector<2x64xf32>
    %185 = arith.mulf %180, %184 : vector<2x64xf32>
    %186 = arith.truncf %185 : vector<2x64xf32> to vector<2x64xbf16>
    %c0_45 = arith.constant 0 : index
    %c0_46 = arith.constant 0 : index
    %187 = vector.load %arg7[%c0_45, %c0_46] : memref<64x512xbf16, #tpu.memory_space<vmem>>, vector<64x512xbf16>
    %cst_47 = arith.constant dense<0.000000e+00> : vector<2x512xf32>
    %188 = tpu.matmul %186, %187, %cst_47 {dimension_numbers = #tpu.dot_dimension_numbers<[1], [0], [0], [1], [0, 0, 1, 1], [], []>} : vector<2x64xbf16>, vector<64x512xbf16>, vector<2x512xf32> -> vector<2x512xf32>
    %c0_48 = arith.constant 0 : index
    %c0_49 = arith.constant 0 : index
    %189 = vector.load %arg9[%c0_48, %c0_49] : memref<1x512xf32, #tpu.memory_space<vmem>>, vector<1x512xf32>
    %190 = vector.broadcast %189 : vector<1x512xf32> to vector<2x512xf32>
    %191 = arith.addf %188, %190 : vector<2x512xf32>
    %cst_50 = arith.constant 0.000000e+00 : f32
    %192 = vector.broadcast %cst_50 : f32 to vector<2x128xf32>
    %cst_51 = arith.constant 0.000000e+00 : f32
    %193 = vector.broadcast %cst_51 : f32 to vector<2x128xf32>
    %194 = arith.truncf %192 : vector<2x128xf32> to vector<2x128xbf16>
    %c0_52 = arith.constant 0 : index
    %c0_53 = arith.constant 0 : index
    %195 = vector.load %arg8[%c0_52, %c0_53] : memref<128x512xbf16, #tpu.memory_space<vmem>>, vector<128x512xbf16>
    %cst_54 = arith.constant dense<0.000000e+00> : vector<2x512xf32>
    %196 = tpu.matmul %194, %195, %cst_54 {dimension_numbers = #tpu.dot_dimension_numbers<[1], [0], [0], [1], [0, 0, 1, 1], [], []>} : vector<2x128xbf16>, vector<128x512xbf16>, vector<2x512xf32> -> vector<2x512xf32>
    %197 = arith.addf %191, %196 : vector<2x512xf32>
    %198 = vector.extract_strided_slice %197 {offsets = [0, 0], sizes = [2, 384], strides = [1, 1]} : vector<2x512xf32> to vector<2x384xf32>
    %199 = arith.negf %198 : vector<2x384xf32>
    %200 = math.exp %199 : vector<2x384xf32>
    %cst_55 = arith.constant 1.000000e+00 : f32
    %201 = vector.broadcast %cst_55 : f32 to vector<2x384xf32>
    %202 = arith.addf %201, %200 : vector<2x384xf32>
    %203 = arith.divf %201, %202 : vector<2x384xf32>
    %204 = vector.extract_strided_slice %197 {offsets = [0, 384], sizes = [2, 128], strides = [1, 1]} : vector<2x512xf32> to vector<2x128xf32>
    %205 = math.tanh %204 : vector<2x128xf32>
    %206 = vector.extract_strided_slice %203 {offsets = [0, 0], sizes = [2, 128], strides = [1, 1]} : vector<2x384xf32> to vector<2x128xf32>
    %207 = vector.extract_strided_slice %203 {offsets = [0, 128], sizes = [2, 128], strides = [1, 1]} : vector<2x384xf32> to vector<2x128xf32>
    %208 = vector.extract_strided_slice %203 {offsets = [0, 256], sizes = [2, 128], strides = [1, 1]} : vector<2x384xf32> to vector<2x128xf32>
    %209 = arith.mulf %207, %193 : vector<2x128xf32>
    %210 = arith.mulf %206, %205 : vector<2x128xf32>
    %211 = arith.addf %209, %210 : vector<2x128xf32>
    %212 = math.tanh %211 : vector<2x128xf32>
    %213 = arith.mulf %208, %212 : vector<2x128xf32>
    %214 = arith.truncf %213 : vector<2x128xf32> to vector<2x128xbf16>
    %c0_56 = arith.constant 0 : index
    %c0_57 = arith.constant 0 : index
    %215 = vector.load %arg8[%c0_56, %c0_57] : memref<128x512xbf16, #tpu.memory_space<vmem>>, vector<128x512xbf16>
    %cst_58 = arith.constant dense<0.000000e+00> : vector<2x512xf32>
    %216 = tpu.matmul %214, %215, %cst_58 {dimension_numbers = #tpu.dot_dimension_numbers<[1], [0], [0], [1], [0, 0, 1, 1], [], []>} : vector<2x128xbf16>, vector<128x512xbf16>, vector<2x512xf32> -> vector<2x512xf32>
    %217 = arith.addf %191, %216 : vector<2x512xf32>
    %218 = vector.extract_strided_slice %217 {offsets = [0, 0], sizes = [2, 384], strides = [1, 1]} : vector<2x512xf32> to vector<2x384xf32>
    %219 = arith.negf %218 : vector<2x384xf32>
    %220 = math.exp %219 : vector<2x384xf32>
    %cst_59 = arith.constant 1.000000e+00 : f32
    %221 = vector.broadcast %cst_59 : f32 to vector<2x384xf32>
    %222 = arith.addf %221, %220 : vector<2x384xf32>
    %223 = arith.divf %221, %222 : vector<2x384xf32>
    %224 = vector.extract_strided_slice %217 {offsets = [0, 384], sizes = [2, 128], strides = [1, 1]} : vector<2x512xf32> to vector<2x128xf32>
    %225 = math.tanh %224 : vector<2x128xf32>
    %226 = vector.extract_strided_slice %223 {offsets = [0, 0], sizes = [2, 128], strides = [1, 1]} : vector<2x384xf32> to vector<2x128xf32>
    %227 = vector.extract_strided_slice %223 {offsets = [0, 128], sizes = [2, 128], strides = [1, 1]} : vector<2x384xf32> to vector<2x128xf32>
    %228 = vector.extract_strided_slice %223 {offsets = [0, 256], sizes = [2, 128], strides = [1, 1]} : vector<2x384xf32> to vector<2x128xf32>
    %229 = arith.mulf %227, %211 : vector<2x128xf32>
    %230 = arith.mulf %226, %225 : vector<2x128xf32>
    %231 = arith.addf %229, %230 : vector<2x128xf32>
    %232 = math.tanh %231 : vector<2x128xf32>
    %233 = arith.mulf %228, %232 : vector<2x128xf32>
    %234 = arith.truncf %233 : vector<2x128xf32> to vector<2x128xbf16>
    %c0_60 = arith.constant 0 : index
    %c0_61 = arith.constant 0 : index
    %235 = vector.load %arg8[%c0_60, %c0_61] : memref<128x512xbf16, #tpu.memory_space<vmem>>, vector<128x512xbf16>
    %cst_62 = arith.constant dense<0.000000e+00> : vector<2x512xf32>
    %236 = tpu.matmul %234, %235, %cst_62 {dimension_numbers = #tpu.dot_dimension_numbers<[1], [0], [0], [1], [0, 0, 1, 1], [], []>} : vector<2x128xbf16>, vector<128x512xbf16>, vector<2x512xf32> -> vector<2x512xf32>
    %237 = arith.addf %191, %236 : vector<2x512xf32>
    %238 = vector.extract_strided_slice %237 {offsets = [0, 0], sizes = [2, 384], strides = [1, 1]} : vector<2x512xf32> to vector<2x384xf32>
    %239 = arith.negf %238 : vector<2x384xf32>
    %240 = math.exp %239 : vector<2x384xf32>
    %cst_63 = arith.constant 1.000000e+00 : f32
    %241 = vector.broadcast %cst_63 : f32 to vector<2x384xf32>
    %242 = arith.addf %241, %240 : vector<2x384xf32>
    %243 = arith.divf %241, %242 : vector<2x384xf32>
    %244 = vector.extract_strided_slice %237 {offsets = [0, 384], sizes = [2, 128], strides = [1, 1]} : vector<2x512xf32> to vector<2x128xf32>
    %245 = math.tanh %244 : vector<2x128xf32>
    %246 = vector.extract_strided_slice %243 {offsets = [0, 0], sizes = [2, 128], strides = [1, 1]} : vector<2x384xf32> to vector<2x128xf32>
    %247 = vector.extract_strided_slice %243 {offsets = [0, 128], sizes = [2, 128], strides = [1, 1]} : vector<2x384xf32> to vector<2x128xf32>
    %248 = vector.extract_strided_slice %243 {offsets = [0, 256], sizes = [2, 128], strides = [1, 1]} : vector<2x384xf32> to vector<2x128xf32>
    %249 = arith.mulf %247, %231 : vector<2x128xf32>
    %250 = arith.mulf %246, %245 : vector<2x128xf32>
    %251 = arith.addf %249, %250 : vector<2x128xf32>
    %252 = math.tanh %251 : vector<2x128xf32>
    %253 = arith.mulf %248, %252 : vector<2x128xf32>
    %254 = arith.truncf %253 : vector<2x128xf32> to vector<2x128xbf16>
    %c0_64 = arith.constant 0 : index
    %c0_65 = arith.constant 0 : index
    %255 = vector.load %arg8[%c0_64, %c0_65] : memref<128x512xbf16, #tpu.memory_space<vmem>>, vector<128x512xbf16>
    %cst_66 = arith.constant dense<0.000000e+00> : vector<2x512xf32>
    %256 = tpu.matmul %254, %255, %cst_66 {dimension_numbers = #tpu.dot_dimension_numbers<[1], [0], [0], [1], [0, 0, 1, 1], [], []>} : vector<2x128xbf16>, vector<128x512xbf16>, vector<2x512xf32> -> vector<2x512xf32>
    %257 = arith.addf %191, %256 : vector<2x512xf32>
    %258 = vector.extract_strided_slice %257 {offsets = [0, 0], sizes = [2, 384], strides = [1, 1]} : vector<2x512xf32> to vector<2x384xf32>
    %259 = arith.negf %258 : vector<2x384xf32>
    %260 = math.exp %259 : vector<2x384xf32>
    %cst_67 = arith.constant 1.000000e+00 : f32
    %261 = vector.broadcast %cst_67 : f32 to vector<2x384xf32>
    %262 = arith.addf %261, %260 : vector<2x384xf32>
    %263 = arith.divf %261, %262 : vector<2x384xf32>
    %264 = vector.extract_strided_slice %257 {offsets = [0, 384], sizes = [2, 128], strides = [1, 1]} : vector<2x512xf32> to vector<2x128xf32>
    %265 = math.tanh %264 : vector<2x128xf32>
    %266 = vector.extract_strided_slice %263 {offsets = [0, 0], sizes = [2, 128], strides = [1, 1]} : vector<2x384xf32> to vector<2x128xf32>
    %267 = vector.extract_strided_slice %263 {offsets = [0, 128], sizes = [2, 128], strides = [1, 1]} : vector<2x384xf32> to vector<2x128xf32>
    %268 = vector.extract_strided_slice %263 {offsets = [0, 256], sizes = [2, 128], strides = [1, 1]} : vector<2x384xf32> to vector<2x128xf32>
    %269 = arith.mulf %267, %251 : vector<2x128xf32>
    %270 = arith.mulf %266, %265 : vector<2x128xf32>
    %271 = arith.addf %269, %270 : vector<2x128xf32>
    %272 = math.tanh %271 : vector<2x128xf32>
    %273 = arith.mulf %268, %272 : vector<2x128xf32>
    %274 = arith.truncf %273 : vector<2x128xf32> to vector<2x128xbf16>
    %c0_68 = arith.constant 0 : index
    %c0_69 = arith.constant 0 : index
    %275 = vector.load %arg8[%c0_68, %c0_69] : memref<128x512xbf16, #tpu.memory_space<vmem>>, vector<128x512xbf16>
    %cst_70 = arith.constant dense<0.000000e+00> : vector<2x512xf32>
    %276 = tpu.matmul %274, %275, %cst_70 {dimension_numbers = #tpu.dot_dimension_numbers<[1], [0], [0], [1], [0, 0, 1, 1], [], []>} : vector<2x128xbf16>, vector<128x512xbf16>, vector<2x512xf32> -> vector<2x512xf32>
    %277 = arith.addf %191, %276 : vector<2x512xf32>
    %278 = vector.extract_strided_slice %277 {offsets = [0, 0], sizes = [2, 384], strides = [1, 1]} : vector<2x512xf32> to vector<2x384xf32>
    %279 = arith.negf %278 : vector<2x384xf32>
    %280 = math.exp %279 : vector<2x384xf32>
    %cst_71 = arith.constant 1.000000e+00 : f32
    %281 = vector.broadcast %cst_71 : f32 to vector<2x384xf32>
    %282 = arith.addf %281, %280 : vector<2x384xf32>
    %283 = arith.divf %281, %282 : vector<2x384xf32>
    %284 = vector.extract_strided_slice %277 {offsets = [0, 384], sizes = [2, 128], strides = [1, 1]} : vector<2x512xf32> to vector<2x128xf32>
    %285 = math.tanh %284 : vector<2x128xf32>
    %286 = vector.extract_strided_slice %283 {offsets = [0, 0], sizes = [2, 128], strides = [1, 1]} : vector<2x384xf32> to vector<2x128xf32>
    %287 = vector.extract_strided_slice %283 {offsets = [0, 128], sizes = [2, 128], strides = [1, 1]} : vector<2x384xf32> to vector<2x128xf32>
    %288 = vector.extract_strided_slice %283 {offsets = [0, 256], sizes = [2, 128], strides = [1, 1]} : vector<2x384xf32> to vector<2x128xf32>
    %289 = arith.mulf %287, %271 : vector<2x128xf32>
    %290 = arith.mulf %286, %285 : vector<2x128xf32>
    %291 = arith.addf %289, %290 : vector<2x128xf32>
    %292 = math.tanh %291 : vector<2x128xf32>
    %293 = arith.mulf %288, %292 : vector<2x128xf32>
    %294 = arith.truncf %293 : vector<2x128xf32> to vector<2x128xbf16>
    %c0_72 = arith.constant 0 : index
    %c0_73 = arith.constant 0 : index
    %295 = vector.load %arg8[%c0_72, %c0_73] : memref<128x512xbf16, #tpu.memory_space<vmem>>, vector<128x512xbf16>
    %cst_74 = arith.constant dense<0.000000e+00> : vector<2x512xf32>
    %296 = tpu.matmul %294, %295, %cst_74 {dimension_numbers = #tpu.dot_dimension_numbers<[1], [0], [0], [1], [0, 0, 1, 1], [], []>} : vector<2x128xbf16>, vector<128x512xbf16>, vector<2x512xf32> -> vector<2x512xf32>
    %297 = arith.addf %191, %296 : vector<2x512xf32>
    %298 = vector.extract_strided_slice %297 {offsets = [0, 0], sizes = [2, 384], strides = [1, 1]} : vector<2x512xf32> to vector<2x384xf32>
    %299 = arith.negf %298 : vector<2x384xf32>
    %300 = math.exp %299 : vector<2x384xf32>
    %cst_75 = arith.constant 1.000000e+00 : f32
    %301 = vector.broadcast %cst_75 : f32 to vector<2x384xf32>
    %302 = arith.addf %301, %300 : vector<2x384xf32>
    %303 = arith.divf %301, %302 : vector<2x384xf32>
    %304 = vector.extract_strided_slice %297 {offsets = [0, 384], sizes = [2, 128], strides = [1, 1]} : vector<2x512xf32> to vector<2x128xf32>
    %305 = math.tanh %304 : vector<2x128xf32>
    %306 = vector.extract_strided_slice %303 {offsets = [0, 0], sizes = [2, 128], strides = [1, 1]} : vector<2x384xf32> to vector<2x128xf32>
    %307 = vector.extract_strided_slice %303 {offsets = [0, 128], sizes = [2, 128], strides = [1, 1]} : vector<2x384xf32> to vector<2x128xf32>
    %308 = vector.extract_strided_slice %303 {offsets = [0, 256], sizes = [2, 128], strides = [1, 1]} : vector<2x384xf32> to vector<2x128xf32>
    %309 = arith.mulf %307, %291 : vector<2x128xf32>
    %310 = arith.mulf %306, %305 : vector<2x128xf32>
    %311 = arith.addf %309, %310 : vector<2x128xf32>
    %312 = math.tanh %311 : vector<2x128xf32>
    %313 = arith.mulf %308, %312 : vector<2x128xf32>
    %314 = arith.truncf %313 : vector<2x128xf32> to vector<2x128xbf16>
    %c0_76 = arith.constant 0 : index
    %c0_77 = arith.constant 0 : index
    %315 = vector.load %arg8[%c0_76, %c0_77] : memref<128x512xbf16, #tpu.memory_space<vmem>>, vector<128x512xbf16>
    %cst_78 = arith.constant dense<0.000000e+00> : vector<2x512xf32>
    %316 = tpu.matmul %314, %315, %cst_78 {dimension_numbers = #tpu.dot_dimension_numbers<[1], [0], [0], [1], [0, 0, 1, 1], [], []>} : vector<2x128xbf16>, vector<128x512xbf16>, vector<2x512xf32> -> vector<2x512xf32>
    %317 = arith.addf %191, %316 : vector<2x512xf32>
    %318 = vector.extract_strided_slice %317 {offsets = [0, 0], sizes = [2, 384], strides = [1, 1]} : vector<2x512xf32> to vector<2x384xf32>
    %319 = arith.negf %318 : vector<2x384xf32>
    %320 = math.exp %319 : vector<2x384xf32>
    %cst_79 = arith.constant 1.000000e+00 : f32
    %321 = vector.broadcast %cst_79 : f32 to vector<2x384xf32>
    %322 = arith.addf %321, %320 : vector<2x384xf32>
    %323 = arith.divf %321, %322 : vector<2x384xf32>
    %324 = vector.extract_strided_slice %317 {offsets = [0, 384], sizes = [2, 128], strides = [1, 1]} : vector<2x512xf32> to vector<2x128xf32>
    %325 = math.tanh %324 : vector<2x128xf32>
    %326 = vector.extract_strided_slice %323 {offsets = [0, 0], sizes = [2, 128], strides = [1, 1]} : vector<2x384xf32> to vector<2x128xf32>
    %327 = vector.extract_strided_slice %323 {offsets = [0, 128], sizes = [2, 128], strides = [1, 1]} : vector<2x384xf32> to vector<2x128xf32>
    %328 = vector.extract_strided_slice %323 {offsets = [0, 256], sizes = [2, 128], strides = [1, 1]} : vector<2x384xf32> to vector<2x128xf32>
    %329 = arith.mulf %327, %311 : vector<2x128xf32>
    %330 = arith.mulf %326, %325 : vector<2x128xf32>
    %331 = arith.addf %329, %330 : vector<2x128xf32>
    %332 = math.tanh %331 : vector<2x128xf32>
    %333 = arith.mulf %328, %332 : vector<2x128xf32>
    %334 = arith.truncf %333 : vector<2x128xf32> to vector<2x128xbf16>
    %c0_80 = arith.constant 0 : index
    %c0_81 = arith.constant 0 : index
    %335 = vector.load %arg8[%c0_80, %c0_81] : memref<128x512xbf16, #tpu.memory_space<vmem>>, vector<128x512xbf16>
    %cst_82 = arith.constant dense<0.000000e+00> : vector<2x512xf32>
    %336 = tpu.matmul %334, %335, %cst_82 {dimension_numbers = #tpu.dot_dimension_numbers<[1], [0], [0], [1], [0, 0, 1, 1], [], []>} : vector<2x128xbf16>, vector<128x512xbf16>, vector<2x512xf32> -> vector<2x512xf32>
    %337 = arith.addf %191, %336 : vector<2x512xf32>
    %338 = vector.extract_strided_slice %337 {offsets = [0, 0], sizes = [2, 384], strides = [1, 1]} : vector<2x512xf32> to vector<2x384xf32>
    %339 = arith.negf %338 : vector<2x384xf32>
    %340 = math.exp %339 : vector<2x384xf32>
    %cst_83 = arith.constant 1.000000e+00 : f32
    %341 = vector.broadcast %cst_83 : f32 to vector<2x384xf32>
    %342 = arith.addf %341, %340 : vector<2x384xf32>
    %343 = arith.divf %341, %342 : vector<2x384xf32>
    %344 = vector.extract_strided_slice %337 {offsets = [0, 384], sizes = [2, 128], strides = [1, 1]} : vector<2x512xf32> to vector<2x128xf32>
    %345 = math.tanh %344 : vector<2x128xf32>
    %346 = vector.extract_strided_slice %343 {offsets = [0, 0], sizes = [2, 128], strides = [1, 1]} : vector<2x384xf32> to vector<2x128xf32>
    %347 = vector.extract_strided_slice %343 {offsets = [0, 128], sizes = [2, 128], strides = [1, 1]} : vector<2x384xf32> to vector<2x128xf32>
    %348 = vector.extract_strided_slice %343 {offsets = [0, 256], sizes = [2, 128], strides = [1, 1]} : vector<2x384xf32> to vector<2x128xf32>
    %349 = arith.mulf %347, %331 : vector<2x128xf32>
    %350 = arith.mulf %346, %345 : vector<2x128xf32>
    %351 = arith.addf %349, %350 : vector<2x128xf32>
    %352 = math.tanh %351 : vector<2x128xf32>
    %353 = arith.mulf %348, %352 : vector<2x128xf32>
    %354 = tpu.concatenate %213, %233, %253, %273, %293, %313, %333, %353 in 0 : vector<2x128xf32>, vector<2x128xf32>, vector<2x128xf32>, vector<2x128xf32>, vector<2x128xf32>, vector<2x128xf32>, vector<2x128xf32>, vector<2x128xf32> -> vector<16x128xf32>
    %cst_84 = arith.constant 1.000000e-01 : f32
    %355 = vector.broadcast %cst_84 : f32 to vector<16x128xf32>
    %356 = arith.mulf %355, %354 : vector<16x128xf32>
    %357 = arith.maximumf %354, %356 : vector<16x128xf32>
    %358 = arith.truncf %357 : vector<16x128xf32> to vector<16x128xbf16>
    %c0_85 = arith.constant 0 : index
    %c0_86 = arith.constant 0 : index
    %359 = vector.load %arg10[%c0_85, %c0_86] : memref<128x2xbf16, #tpu.memory_space<vmem>>, vector<128x2xbf16>
    %cst_87 = arith.constant dense<0.000000e+00> : vector<16x2xf32>
    %360 = tpu.matmul %358, %359, %cst_87 {dimension_numbers = #tpu.dot_dimension_numbers<[1], [0], [0], [1], [0, 0, 1, 1], [], []>} : vector<16x128xbf16>, vector<128x2xbf16>, vector<16x2xf32> -> vector<16x2xf32>
    %c0_88 = arith.constant 0 : index
    %c0_89 = arith.constant 0 : index
    %361 = vector.load %arg1[%c0_88, %c0_89] : memref<16x2xf32, #tpu.memory_space<vmem>>, vector<16x2xf32>
    %362 = arith.addf %360, %361 : vector<16x2xf32>
    %c0_90 = arith.constant 0 : index
    %c0_91 = arith.constant 0 : index
    %363 = vector.load %arg11[%c0_90, %c0_91] : memref<16x2xf32, #tpu.memory_space<vmem>>, vector<16x2xf32>
    tpu.vector_store %arg11[%c0_90, %c0_91], %362 {strides = array<i32>} : memref<16x2xf32, #tpu.memory_space<vmem>>, vector<16x2xf32>,
    return
  }
}

</mosaic_0001>

<llo_original>
// kernel: vlstm_f_forward.1
$region0: #{vlstm_f_forward.1}
  #allocation0 [shape = 'u32[]', space=smem, size = 0x4, offset = 0x4, fixed_abs, tag = 'smem constant byte address 0x4 - core index']
  #allocation1 [shape = 'u32[144,128]{1,0:T(1,128)}', space=vmem, size = 0x12000, scoped, tag = 'internal scratch']
  %s0 = inlined_call_operand.vmem [shape: f32[16,6], index: 0, kind: input, shape index: {}]
  %s1 = inlined_call_operand.vmem [shape: f32[16,2], index: 1, kind: input, shape index: {}]
  %s2 = inlined_call_operand.vmem [shape: bf16[6,64], index: 2, kind: input, shape index: {}]
  %s3 = inlined_call_operand.vmem [shape: f32[1,64], index: 3, kind: input, shape index: {}]
  %s4 = inlined_call_operand.hbm [shape: bf16[64,256], index: 4, kind: input, shape index: {}]
  %s5 = inlined_call_operand.hbm [shape: bf16[64,256], index: 5, kind: input, shape index: {}]
  %s6 = inlined_call_operand.vmem [shape: f32[1,256], index: 6, kind: input, shape index: {}]
  %s7 = inlined_call_operand.vmem [shape: bf16[64,512], index: 7, kind: input, shape index: {}]
  %s8 = inlined_call_operand.hbm [shape: bf16[128,512], index: 8, kind: input, shape index: {}]
  %s9 = inlined_call_operand.vmem [shape: f32[1,512], index: 9, kind: input, shape index: {}]
  %s10 = inlined_call_operand.vmem [shape: bf16[128,2], index: 10, kind: input, shape index: {}]
  %s11 = inlined_call_operand.vmem [shape: f32[16,2], index: 11, kind: output, shape index: {}]
  %s12 = sld [smem:[#allocation0]]
  $region66: #{vlstm_f_forward.1} parent=0
    _
  %s14 = ssub.s32 1, %s12
  %s15 = scalar_select 0, %s14, %s12
  $region1: #{vlstm_f_forward.1} parent=0
    #allocation2 [shape = 'u8[32768]{0}', space=vmem, size = 0x8000, scoped, tag = 'input window, operand 4, single buffered']
    #allocation3 [shape = 's32[1]{0}', space=sflag, size = 0x4, scoped, tag = 'scoped memory for vlstm_f_forward.1']
    #allocation4 [shape = 'u8[32768]{0}', space=vmem, size = 0x8000, scoped, tag = 'input window, operand 5, single buffered']
    #allocation5 [shape = 's32[1]{0}', space=sflag, size = 0x4, scoped, tag = 'scoped memory for vlstm_f_forward.1']
    #allocation6 [shape = 'u8[131072]{0}', space=vmem, size = 0x20000, scoped, tag = 'input window, operand 8, single buffered']
    %16 = vsyncpa [#allocation3], 0
    %17 = vsyncpa [#allocation5], 0
    // Predicated region
    $region2: #{vlstm_f_forward.1} parent=1 // pred_check
      _
    $region3: #{vlstm_f_forward.1} parent=1 // pred_check_branch
      %19 = sbr.rel (0) target = $region5
    $region4: #{vlstm_f_forward.1} parent=1 // pred_region
      _
    $region5: #{vlstm_f_forward.1} parent=1 // pred_fallthru
      _
    // Predicated region
    $region6: #{vlstm_f_forward.1} parent=1 // pred_check
      _
    $region7: #{vlstm_f_forward.1} parent=1 // pred_check_branch
      %21 = sbr.rel (0) target = $region9
    $region8: #{vlstm_f_forward.1} parent=1 // pred_region
      _
    $region9: #{vlstm_f_forward.1} parent=1 // pred_fallthru
      _
    // Predicated region
    $region10: #{vlstm_f_forward.1} parent=1 // pred_check
      _
    $region11: #{vlstm_f_forward.1} parent=1 // pred_check_branch
      %23 = sbr.rel (0) target = $region13
    $region12: #{vlstm_f_forward.1} parent=1 // pred_region
      _
    $region13: #{vlstm_f_forward.1} parent=1 // pred_fallthru
      _
    // Predicated region
    $region14: #{vlstm_f_forward.1} parent=1 // pred_check
      _
    $region15: #{vlstm_f_forward.1} parent=1 // pred_check_branch
      %25 = sbr.rel (0) target = $region17
    $region16: #{vlstm_f_forward.1} parent=1 // pred_region
      _
    $region17: #{vlstm_f_forward.1} parent=1 // pred_fallthru
      _
    // Predicated region
    $region18: #{vlstm_f_forward.1} parent=1 // pred_check
      _
    $region19: #{vlstm_f_forward.1} parent=1 // pred_check_branch
      %27 = sbr.rel (0) target = $region21
    $region20: #{vlstm_f_forward.1} parent=1 // pred_region
      %s29 = ssub.s32 1024, 1024
      %30 = vsyncadd [#allocation3], %s29
      %s31 = sshll.u32 [#allocation2], 4
      %s32 = int_to_ptr.vmem [resolvable:$true] %s31
      %37 = dma.hbm_to_vmem [thread:$0]  %s4, 1024, %s32, [#allocation3], 128, 128, 8
    $region21: #{vlstm_f_forward.1} parent=1 // pred_fallthru
      _
    // Predicated region
    $region22: #{vlstm_f_forward.1} parent=1 // pred_check
      _
    $region23: #{vlstm_f_forward.1} parent=1 // pred_check_branch
      %39 = sbr.rel (0) target = $region25
    $region24: #{vlstm_f_forward.1} parent=1 // pred_region
      %s41 = ssub.s32 1024, 1024
      %42 = vsyncadd [#allocation5], %s41
      %s43 = sshll.u32 [#allocation4], 4
      %s44 = int_to_ptr.vmem [resolvable:$true] %s43
      %49 = dma.hbm_to_vmem [thread:$0]  %s5, 1024, %s44, [#allocation5], 128, 128, 8
    $region25: #{vlstm_f_forward.1} parent=1 // pred_fallthru
      _
    // Predicated region
    $region26: #{vlstm_f_forward.1} parent=1 // pred_check
      _
    $region27: #{vlstm_f_forward.1} parent=1 // pred_check_branch
      %51 = sbr.rel (0) target = $region29
    $region28: #{vlstm_f_forward.1} parent=1 // pred_region
      _
    $region29: #{vlstm_f_forward.1} parent=1 // pred_fallthru
      _
    // Predicated region
    $region30: #{vlstm_f_forward.1} parent=1 // pred_check
      _
    $region31: #{vlstm_f_forward.1} parent=1 // pred_check_branch
      %53 = sbr.rel (0) target = $region33
    $region32: #{vlstm_f_forward.1} parent=1 // pred_region
      _
    $region33: #{vlstm_f_forward.1} parent=1 // pred_fallthru
      _
    // Predicated region
    $region34: #{vlstm_f_forward.1} parent=1 // pred_check
      _
    $region35: #{vlstm_f_forward.1} parent=1 // pred_check_branch
      %55 = sbr.rel (0) target = $region37
    $region36: #{vlstm_f_forward.1} parent=1 // pred_region
      %s57 = ssub.s32 4096, 4096
      %58 = vsyncadd [#allocation5], %s57
      %s59 = sshll.u32 [#allocation6], 4
      %s60 = int_to_ptr.vmem [resolvable:$true] %s59
      %65 = dma.hbm_to_vmem [thread:$0]  %s8, 4096, %s60, [#allocation5], 256, 256, 16
    $region37: #{vlstm_f_forward.1} parent=1 // pred_fallthru
      _
    // Predicated region
    $region38: #{vlstm_f_forward.1} parent=1 // pred_check
      _
    $region39: #{vlstm_f_forward.1} parent=1 // pred_check_branch
      %67 = sbr.rel (0) target = $region41
    $region40: #{vlstm_f_forward.1} parent=1 // pred_region
      _
    $region41: #{vlstm_f_forward.1} parent=1 // pred_fallthru
      _
    // Predicated region
    $region42: #{vlstm_f_forward.1} parent=1 // pred_check
      _
    $region43: #{vlstm_f_forward.1} parent=1 // pred_check_branch
      %69 = sbr.rel (0) target = $region45
    $region44: #{vlstm_f_forward.1} parent=1 // pred_region
      _
    $region45: #{vlstm_f_forward.1} parent=1 // pred_fallthru
      _
    // Predicated region
    $region46: #{vlstm_f_forward.1} parent=1 // pred_check
      _
    $region47: #{vlstm_f_forward.1} parent=1 // pred_check_branch
      %71 = sbr.rel (0) target = $region49
    $region48: #{vlstm_f_forward.1} parent=1 // pred_region
      %72 = dma.done [#allocation3], 1024
    $region49: #{vlstm_f_forward.1} parent=1 // pred_fallthru
      _
    // Predicated region
    $region50: #{vlstm_f_forward.1} parent=1 // pred_check
      _
    $region51: #{vlstm_f_forward.1} parent=1 // pred_check_branch
      %74 = sbr.rel (0) target = $region53
    $region52: #{vlstm_f_forward.1} parent=1 // pred_region
      %75 = dma.done [#allocation5], 1024
    $region53: #{vlstm_f_forward.1} parent=1 // pred_fallthru
      _
    // Predicated region
    $region54: #{vlstm_f_forward.1} parent=1 // pred_check
      _
    $region55: #{vlstm_f_forward.1} parent=1 // pred_check_branch
      %77 = sbr.rel (0) target = $region57
    $region56: #{vlstm_f_forward.1} parent=1 // pred_region
      %78 = dma.done [#allocation5], 4096
    $region57: #{vlstm_f_forward.1} parent=1 // pred_fallthru
      _
    %v80 = vld [vmem:[%s0] sm:$0xff]
    %v81 = vld [vmem:[%s0 + $0x8] sm:$0xff]
    %v82 = vpack.c.bf16 %v81, %v80
    %v83 = vld [vmem:[%s2] sm:$0x7]
    %v84 = vld [vmem:[%s3] sm:$0x1]
    %v86 = vlaneseq
    %v87 = vshrl.u32 %v86, 7
    %v88 = vsub.s32 0, %v87
    %v89 = vrot.slane %v84, %v88
    %vm91 = vcmask 48128
    %v93 = vsel %vm91, %v82, 0
    %vm95 = vcmask 1042432
    %v97 = vsel %vm95, %v83, 0
    %99 = vmatprep.subr.bf16.mxu0 0
    %100 = vmatpush1.bf16.msra.mxu0 %v97
    %101 = vmatprep.subr.bf16.mxu0 0
    %102 = vmatpush1.bf16.msra.mxu0 0
    %103 = vmatprep.subr.bf16.mxu0 0
    %104 = vmatpush1.bf16.msra.mxu0 0
    %105 = vmatprep.subr.bf16.mxu0 0
    %106 = vmatpush1.bf16.msra.mxu0 0
    %107 = vmatprep.subr.bf16.mxu0 0
    %108 = vmatpush1.bf16.msra.mxu0 0
    %109 = vmatprep.subr.bf16.mxu0 0
    %110 = vmatpush1.bf16.msra.mxu0 0
    %111 = vmatprep.subr.bf16.mxu0 0
    %112 = vmatpush1.bf16.msra.mxu0 0
    %113 = vmatprep.subr.bf16.mxu0 0
    %114 = vmatpush1.bf16.msra.mxu0 0
    %115 = vmatprep.subr.bf16.mxu0 0
    %116 = vmatpush1.bf16.msra.mxu0 0
    %117 = vmatprep.subr.bf16.mxu0 0
    %118 = vmatpush1.bf16.msra.mxu0 0
    %119 = vmatprep.subr.bf16.mxu0 0
    %120 = vmatpush1.bf16.msra.mxu0 0
    %121 = vmatprep.subr.bf16.mxu0 0
    %122 = vmatpush1.bf16.msra.mxu0 0
    %123 = vmatprep.subr.bf16.mxu0 0
    %124 = vmatpush1.bf16.msra.mxu0 0
    %125 = vmatprep.subr.bf16.mxu0 0
    %126 = vmatpush1.bf16.msra.mxu0 0
    %127 = vmatprep.subr.bf16.mxu0 0
    %128 = vmatpush1.bf16.msra.mxu0 0
    %129 = vmatprep.subr.bf16.mxu0 0
    %130 = vmatpush1.bf16.msra.mxu0 0
    %131 = vmatprep.mubr.bf16.mxu0 0
    %132 = vmatmul.mubr.bf16.gmra.mrb[0].mxu0 %v93
    %v133 = vpop.f32.mrb[0].mxu0
    %v134 = vadd.f32 %v89, %v133
    %v135 = vpop.f32.mrb[0].mxu0
    %v136 = vpop.f32.mrb[0].mxu0
    %v137 = vadd.f32 %v89, %v136
    %v138 = vpop.f32.mrb[0].mxu0
    %139 = vdwg.mxu0
    %v140 = vmul.f32 %v134, 0.1
    %v141 = vmul.f32 %v137, 0.1
    %v142 = vmax.f32 %v134, %v140
    %v143 = vmax.f32 %v137, %v141
    %v144 = vpack.c.bf16 %v143, %v142
    %v145 = vld [vmem:[#allocation2] sm:$0xff]
    %v146 = vld [vmem:[#allocation2 + $0x8] sm:$0xff]
    %v147 = vld [vmem:[#allocation2 + $0x10] sm:$0xff]
    %v148 = vld [vmem:[#allocation2 + $0x18] sm:$0xff]
    %v149 = vld [vmem:[#allocation2 + $0x20] sm:$0xff]
    %v150 = vld [vmem:[#allocation2 + $0x28] sm:$0xff]
    %v151 = vld [vmem:[#allocation2 + $0x30] sm:$0xff]
    %v152 = vld [vmem:[#allocation2 + $0x38] sm:$0xff]
    %v153 = vld [vmem:[%s6] sm:$0x3]
    %v155 = vlaneseq
    %v156 = vshrl.u32 %v155, 7
    %v157 = vsub.s32 0, %v156
    %v158 = vrot.slane %v153, %v157
    %v159 = vlaneseq
    %v160 = vshrl.u32 %v159, 7
    %v161 = vsub.s32 1, %v160
    %v162 = vrot.slane %v153, %v161
    %v173 = vunpack.c.l.b16 %v145
    %v174 = vunpack.c.h.b16 %v145
    %v175 = vunpack.c.l.b16 %v146
    %v176 = vunpack.c.h.b16 %v146
    %v177 = vunpack.c.l.b16 %v147
    %v178 = vunpack.c.h.b16 %v147
    %v179 = vunpack.c.l.b16 %v148
    %v180 = vunpack.c.h.b16 %v148
    %v181 = vunpack.c.l.b16 %v149
    %v182 = vunpack.c.h.b16 %v149
    %v183 = vunpack.c.l.b16 %v150
    %v184 = vunpack.c.h.b16 %v150
    %v185 = vunpack.c.l.b16 %v151
    %v186 = vunpack.c.h.b16 %v151
    %v187 = vunpack.c.l.b16 %v152
    %v188 = vunpack.c.h.b16 %v152
    %v189 = vpack.c.b16 %v175, %v173
    %v190 = vpack.c.b16 %v176, %v174
    %v191 = vpack.c.b16 %v179, %v177
    %v192 = vpack.c.b16 %v180, %v178
    %v193 = vpack.c.b16 %v183, %v181
    %v194 = vpack.c.b16 %v184, %v182
    %v195 = vpack.c.b16 %v187, %v185
    %v196 = vpack.c.b16 %v188, %v186
    %vm205 = vcmask 523264
    %v207 = vsel %vm205, %v144, 0
    %209 = vmatprep.subr.bf16.mxu0 %v190
    %210 = vmatpush1.bf16.msra.mxu0 %v189
    %211 = vmatprep.subr.bf16.mxu0 %v192
    %212 = vmatpush1.bf16.msra.mxu0 %v191
    %213 = vmatprep.subr.bf16.mxu0 %v194
    %214 = vmatpush1.bf16.msra.mxu0 %v193
    %215 = vmatprep.subr.bf16.mxu0 %v196
    %216 = vmatpush1.bf16.msra.mxu0 %v195
    %217 = vmatprep.subr.bf16.mxu0 0
    %218 = vmatpush1.bf16.msra.mxu0 0
    %219 = vmatprep.subr.bf16.mxu0 0
    %220 = vmatpush1.bf16.msra.mxu0 0
    %221 = vmatprep.subr.bf16.mxu0 0
    %222 = vmatpush1.bf16.msra.mxu0 0
    %223 = vmatprep.subr.bf16.mxu0 0
    %224 = vmatpush1.bf16.msra.mxu0 0
    %225 = vmatprep.subr.bf16.mxu0 0
    %226 = vmatpush1.bf16.msra.mxu0 0
    %227 = vmatprep.subr.bf16.mxu0 0
    %228 = vmatpush1.bf16.msra.mxu0 0
    %229 = vmatprep.subr.bf16.mxu0 0
    %230 = vmatpush1.bf16.msra.mxu0 0
    %231 = vmatprep.subr.bf16.mxu0 0
    %232 = vmatpush1.bf16.msra.mxu0 0
    %233 = vmatprep.subr.bf16.mxu0 0
    %234 = vmatpush1.bf16.msra.mxu0 0
    %235 = vmatprep.subr.bf16.mxu0 0
    %236 = vmatpush1.bf16.msra.mxu0 0
    %237 = vmatprep.subr.bf16.mxu0 0
    %238 = vmatpush1.bf16.msra.mxu0 0
    %239 = vmatprep.subr.bf16.mxu0 0
    %240 = vmatpush1.bf16.msra.mxu0 0
    %241 = vmatprep.mubr.bf16.mxu0 0
    %242 = vmatmul.mubr.bf16.gmra.mrb[0].mxu0 %v207
    %v243 = vpop.f32.mrb[0].mxu0
    %v244 = vadd.f32 %v158, %v243
    %v245 = vpop.f32.mrb[0].mxu0
    %v246 = vadd.f32 %v162, %v245
    %v247 = vpop.f32.mrb[0].mxu0
    %v248 = vadd.f32 %v158, %v247
    %v249 = vpop.f32.mrb[0].mxu0
    %v250 = vadd.f32 %v162, %v249
    %251 = vdwg.mxu0
    %v252 = vld [vmem:[#allocation4] sm:$0xff]
    %v253 = vld [vmem:[#allocation4 + $0x8] sm:$0xff]
    %v254 = vld [vmem:[#allocation4 + $0x10] sm:$0xff]
    %v255 = vld [vmem:[#allocation4 + $0x18] sm:$0xff]
    %v256 = vld [vmem:[#allocation4 + $0x20] sm:$0xff]
    %v257 = vld [vmem:[#allocation4 + $0x28] sm:$0xff]
    %v258 = vld [vmem:[#allocation4 + $0x30] sm:$0xff]
    %v259 = vld [vmem:[#allocation4 + $0x38] sm:$0xff]
    %v268 = vunpack.c.l.b16 %v252
    %v269 = vunpack.c.h.b16 %v252
    %v270 = vunpack.c.l.b16 %v253
    %v271 = vunpack.c.h.b16 %v253
    %v272 = vunpack.c.l.b16 %v254
    %v273 = vunpack.c.h.b16 %v254
    %v274 = vunpack.c.l.b16 %v255
    %v275 = vunpack.c.h.b16 %v255
    %v276 = vunpack.c.l.b16 %v256
    %v277 = vunpack.c.h.b16 %v256
    %v278 = vunpack.c.l.b16 %v257
    %v279 = vunpack.c.h.b16 %v257
    %v280 = vunpack.c.l.b16 %v258
    %v281 = vunpack.c.h.b16 %v258
    %v282 = vunpack.c.l.b16 %v259
    %v283 = vunpack.c.h.b16 %v259
    %v284 = vpack.c.b16 %v270, %v268
    %v285 = vpack.c.b16 %v271, %v269
    %v286 = vpack.c.b16 %v274, %v272
    %v287 = vpack.c.b16 %v275, %v273
    %v288 = vpack.c.b16 %v278, %v276
    %v289 = vpack.c.b16 %v279, %v277
    %v290 = vpack.c.b16 %v282, %v280
    %v291 = vpack.c.b16 %v283, %v281
    %v301 = vsel %vm205, 0, 0
    %303 = vmatprep.subr.bf16.mxu0 %v285
    %304 = vmatpush1.bf16.msra.mxu0 %v284
    %305 = vmatprep.subr.bf16.mxu0 %v287
    %306 = vmatpush1.bf16.msra.mxu0 %v286
    %307 = vmatprep.subr.bf16.mxu0 %v289
    %308 = vmatpush1.bf16.msra.mxu0 %v288
    %309 = vmatprep.subr.bf16.mxu0 %v291
    %310 = vmatpush1.bf16.msra.mxu0 %v290
    %311 = vmatprep.subr.bf16.mxu0 0
    %312 = vmatpush1.bf16.msra.mxu0 0
    %313 = vmatprep.subr.bf16.mxu0 0
    %314 = vmatpush1.bf16.msra.mxu0 0
    %315 = vmatprep.subr.bf16.mxu0 0
    %316 = vmatpush1.bf16.msra.mxu0 0
    %317 = vmatprep.subr.bf16.mxu0 0
    %318 = vmatpush1.bf16.msra.mxu0 0
    %319 = vmatprep.subr.bf16.mxu0 0
    %320 = vmatpush1.bf16.msra.mxu0 0
    %321 = vmatprep.subr.bf16.mxu0 0
    %322 = vmatpush1.bf16.msra.mxu0 0
    %323 = vmatprep.subr.bf16.mxu0 0
    %324 = vmatpush1.bf16.msra.mxu0 0
    %325 = vmatprep.subr.bf16.mxu0 0
    %326 = vmatpush1.bf16.msra.mxu0 0
    %327 = vmatprep.subr.bf16.mxu0 0
    %328 = vmatpush1.bf16.msra.mxu0 0
    %329 = vmatprep.subr.bf16.mxu0 0
    %330 = vmatpush1.bf16.msra.mxu0 0
    %331 = vmatprep.subr.bf16.mxu0 0
    %332 = vmatpush1.bf16.msra.mxu0 0
    %333 = vmatprep.subr.bf16.mxu0 0
    %334 = vmatpush1.bf16.msra.mxu0 0
    %335 = vmatprep.mubr.bf16.mxu0 0
    %336 = vmatmul.mubr.bf16.gmra.mrb[0].mxu0 %v301
    %v337 = vpop.f32.mrb[0].mxu0
    %v338 = vadd.f32 0.0, %v337
    %v339 = vpop.f32.mrb[0].mxu0
    %v340 = vadd.f32 0.0, %v339
    %v341 = vpop.f32.mrb[0].mxu0
    %v342 = vpop.f32.mrb[0].mxu0
    %343 = vdwg.mxu0
    %v344 = vadd.f32 %v244, %v338
    %v345 = vadd.f32 %v246, %v340
    %v346 = vxor.u32 %v344, 2147483648
    %v347 = vxor.u32 %v345, 2147483648
    %v348 = vmul.f32 %v346, 1.442695
    %v349 = vpow.pop %v348
    %v350 = vmul.f32 %v347, 1.442695
    %v351 = vpow.pop %v350
    %v352 = vadd.f32 %v349, 1.0
    %v353 = vadd.f32 %v351, 1.0
    %v354 = vrcp.pop %v352
    %v355 = vmul.f32 1.0, %v354
    %v356 = vrcp.pop %v353
    %v357 = vmul.f32 1.0, %v356
    %v358 = vtanh.pop %v345
    %v359 = vmul.f32 %v355, 0.0
    %361 = vrot.lane.b32.xlu0 %v358, 64
    %v362 = vpop.permute.xlu0 %361
    %v364 = vmul.f32 %v355, %v362
    %366 = vrot.lane.b32.xlu0 %v364, 64
    %v367 = vpop.permute.xlu0 %366
    %v369 = vadd.f32 %v359, %v367
    %v370 = vtanh.pop %v369
    %372 = vrot.lane.b32.xlu0 %v370, 64
    %v373 = vpop.permute.xlu0 %372
    %v375 = vmul.f32 %v357, %v373
    %v376 = vpack.c.bf16 %v375, %v375
    %v378 = vsel %vm205, %v376, 0
    %380 = vmatprep.subr.bf16.mxu0 %v285
    %381 = vmatpush1.bf16.msra.mxu0 %v284
    %382 = vmatprep.subr.bf16.mxu0 %v287
    %383 = vmatpush1.bf16.msra.mxu0 %v286
    %384 = vmatprep.subr.bf16.mxu0 %v289
    %385 = vmatpush1.bf16.msra.mxu0 %v288
    %386 = vmatprep.subr.bf16.mxu0 %v291
    %387 = vmatpush1.bf16.msra.mxu0 %v290
    %388 = vmatprep.subr.bf16.mxu0 0
    %389 = vmatpush1.bf16.msra.mxu0 0
    %390 = vmatprep.subr.bf16.mxu0 0
    %391 = vmatpush1.bf16.msra.mxu0 0
    %392 = vmatprep.subr.bf16.mxu0 0
    %393 = vmatpush1.bf16.msra.mxu0 0
    %394 = vmatprep.subr.bf16.mxu0 0
    %395 = vmatpush1.bf16.msra.mxu0 0
    %396 = vmatprep.subr.bf16.mxu0 0
    %397 = vmatpush1.bf16.msra.mxu0 0
    %398 = vmatprep.subr.bf16.mxu0 0
    %399 = vmatpush1.bf16.msra.mxu0 0
    %400 = vmatprep.subr.bf16.mxu0 0
    %401 = vmatpush1.bf16.msra.mxu0 0
    %402 = vmatprep.subr.bf16.mxu0 0
    %403 = vmatpush1.bf16.msra.mxu0 0
    %404 = vmatprep.subr.bf16.mxu0 0
    %405 = vmatpush1.bf16.msra.mxu0 0
    %406 = vmatprep.subr.bf16.mxu0 0
    %407 = vmatpush1.bf16.msra.mxu0 0
    %408 = vmatprep.subr.bf16.mxu0 0
    %409 = vmatpush1.bf16.msra.mxu0 0
    %410 = vmatprep.subr.bf16.mxu0 0
    %411 = vmatpush1.bf16.msra.mxu0 0
    %412 = vmatprep.mubr.bf16.mxu0 0
    %413 = vmatmul.mubr.bf16.gmra.mrb[0].mxu0 %v378
    %v414 = vpop.f32.mrb[0].mxu0
    %v415 = vadd.f32 0.0, %v414
    %v416 = vpop.f32.mrb[0].mxu0
    %v417 = vadd.f32 0.0, %v416
    %v418 = vpop.f32.mrb[0].mxu0
    %v419 = vpop.f32.mrb[0].mxu0
    %420 = vdwg.mxu0
    %v423 = vrot.slane %v415, 6
    %v424 = vrot.slane %v417, 6
    %v427 = vadd.f32 %v244, %v423
    %v428 = vadd.f32 %v246, %v424
    %v429 = vxor.u32 %v427, 2147483648
    %v430 = vxor.u32 %v428, 2147483648
    %v431 = vmul.f32 %v429, 1.442695
    %v432 = vpow.pop %v431
    %v433 = vmul.f32 %v430, 1.442695
    %v434 = vpow.pop %v433
    %v435 = vadd.f32 %v432, 1.0
    %v436 = vadd.f32 %v434, 1.0
    %v437 = vrcp.pop %v435
    %v438 = vmul.f32 1.0, %v437
    %v439 = vrcp.pop %v436
    %v440 = vmul.f32 1.0, %v439
    %v441 = vtanh.pop %v428
    %v443 = vrot.slane %v369, 6
    %v445 = vmul.f32 %v438, %v443
    %447 = vrot.lane.b32.xlu0 %v441, 64
    %v448 = vpop.permute.xlu0 %447
    %v450 = vmul.f32 %v438, %v448
    %452 = vrot.lane.b32.xlu0 %v450, 64
    %v453 = vpop.permute.xlu0 %452
    %v455 = vadd.f32 %v445, %v453
    %v456 = vtanh.pop %v455
    %458 = vrot.lane.b32.xlu0 %v456, 64
    %v459 = vpop.permute.xlu0 %458
    %v461 = vmul.f32 %v440, %v459
    %v462 = vpack.c.bf16 %v461, %v461
    %v464 = vrot.slane %v462, 1
    %v466 = vsel %vm205, %v464, 0
    %468 = vmatprep.subr.bf16.mxu0 %v285
    %469 = vmatpush1.bf16.msra.mxu0 %v284
    %470 = vmatprep.subr.bf16.mxu0 %v287
    %471 = vmatpush1.bf16.msra.mxu0 %v286
    %472 = vmatprep.subr.bf16.mxu0 %v289
    %473 = vmatpush1.bf16.msra.mxu0 %v288
    %474 = vmatprep.subr.bf16.mxu0 %v291
    %475 = vmatpush1.bf16.msra.mxu0 %v290
    %476 = vmatprep.subr.bf16.mxu0 0
    %477 = vmatpush1.bf16.msra.mxu0 0
    %478 = vmatprep.subr.bf16.mxu0 0
    %479 = vmatpush1.bf16.msra.mxu0 0
    %480 = vmatprep.subr.bf16.mxu0 0
    %481 = vmatpush1.bf16.msra.mxu0 0
    %482 = vmatprep.subr.bf16.mxu0 0
    %483 = vmatpush1.bf16.msra.mxu0 0
    %484 = vmatprep.subr.bf16.mxu0 0
    %485 = vmatpush1.bf16.msra.mxu0 0
    %486 = vmatprep.subr.bf16.mxu0 0
    %487 = vmatpush1.bf16.msra.mxu0 0
    %488 = vmatprep.subr.bf16.mxu0 0
    %489 = vmatpush1.bf16.msra.mxu0 0
    %490 = vmatprep.subr.bf16.mxu0 0
    %491 = vmatpush1.bf16.msra.mxu0 0
    %492 = vmatprep.subr.bf16.mxu0 0
    %493 = vmatpush1.bf16.msra.mxu0 0
    %494 = vmatprep.subr.bf16.mxu0 0
    %495 = vmatpush1.bf16.msra.mxu0 0
    %496 = vmatprep.subr.bf16.mxu0 0
    %497 = vmatpush1.bf16.msra.mxu0 0
    %498 = vmatprep.subr.bf16.mxu0 0
    %499 = vmatpush1.bf16.msra.mxu0 0
    %500 = vmatprep.mubr.bf16.mxu0 0
    %501 = vmatmul.mubr.bf16.gmra.mrb[0].mxu0 %v466
    %v502 = vpop.f32.mrb[0].mxu0
    %v503 = vadd.f32 0.0, %v502
    %v504 = vpop.f32.mrb[0].mxu0
    %v505 = vadd.f32 0.0, %v504
    %v506 = vpop.f32.mrb[0].mxu0
    %v507 = vpop.f32.mrb[0].mxu0
    %508 = vdwg.mxu0
    %v511 = vrot.slane %v503, 4
    %v512 = vrot.slane %v505, 4
    %v515 = vadd.f32 %v244, %v511
    %v516 = vadd.f32 %v246, %v512
    %v517 = vxor.u32 %v515, 2147483648
    %v518 = vxor.u32 %v516, 2147483648
    %v519 = vmul.f32 %v517, 1.442695
    %v520 = vpow.pop %v519
    %v521 = vmul.f32 %v518, 1.442695
    %v522 = vpow.pop %v521
    %v523 = vadd.f32 %v520, 1.0
    %v524 = vadd.f32 %v522, 1.0
    %v525 = vrcp.pop %v523
    %v526 = vmul.f32 1.0, %v525
    %v527 = vrcp.pop %v524
    %v528 = vmul.f32 1.0, %v527
    %v529 = vtanh.pop %v516
    %v531 = vrot.slane %v455, 6
    %v533 = vmul.f32 %v526, %v531
    %535 = vrot.lane.b32.xlu0 %v529, 64
    %v536 = vpop.permute.xlu0 %535
    %v538 = vmul.f32 %v526, %v536
    %540 = vrot.lane.b32.xlu0 %v538, 64
    %v541 = vpop.permute.xlu0 %540
    %v543 = vadd.f32 %v533, %v541
    %v544 = vtanh.pop %v543
    %546 = vrot.lane.b32.xlu0 %v544, 64
    %v547 = vpop.permute.xlu0 %546
    %v549 = vmul.f32 %v528, %v547
    %v550 = vpack.c.bf16 %v549, %v549
    %v552 = vrot.slane %v550, 2
    %v554 = vsel %vm205, %v552, 0
    %556 = vmatprep.subr.bf16.mxu0 %v285
    %557 = vmatpush1.bf16.msra.mxu0 %v284
    %558 = vmatprep.subr.bf16.mxu0 %v287
    %559 = vmatpush1.bf16.msra.mxu0 %v286
    %560 = vmatprep.subr.bf16.mxu0 %v289
    %561 = vmatpush1.bf16.msra.mxu0 %v288
    %562 = vmatprep.subr.bf16.mxu0 %v291
    %563 = vmatpush1.bf16.msra.mxu0 %v290
    %564 = vmatprep.subr.bf16.mxu0 0
    %565 = vmatpush1.bf16.msra.mxu0 0
    %566 = vmatprep.subr.bf16.mxu0 0
    %567 = vmatpush1.bf16.msra.mxu0 0
    %568 = vmatprep.subr.bf16.mxu0 0
    %569 = vmatpush1.bf16.msra.mxu0 0
    %570 = vmatprep.subr.bf16.mxu0 0
    %571 = vmatpush1.bf16.msra.mxu0 0
    %572 = vmatprep.subr.bf16.mxu0 0
    %573 = vmatpush1.bf16.msra.mxu0 0
    %574 = vmatprep.subr.bf16.mxu0 0
    %575 = vmatpush1.bf16.msra.mxu0 0
    %576 = vmatprep.subr.bf16.mxu0 0
    %577 = vmatpush1.bf16.msra.mxu0 0
    %578 = vmatprep.subr.bf16.mxu0 0
    %579 = vmatpush1.bf16.msra.mxu0 0
    %580 = vmatprep.subr.bf16.mxu0 0
    %581 = vmatpush1.bf16.msra.mxu0 0
    %582 = vmatprep.subr.bf16.mxu0 0
    %583 = vmatpush1.bf16.msra.mxu0 0
    %584 = vmatprep.subr.bf16.mxu0 0
    %585 = vmatpush1.bf16.msra.mxu0 0
    %586 = vmatprep.subr.bf16.mxu0 0
    %587 = vmatpush1.bf16.msra.mxu0 0
    %588 = vmatprep.mubr.bf16.mxu0 0
    %589 = vmatmul.mubr.bf16.gmra.mrb[0].mxu0 %v554
    %v590 = vpop.f32.mrb[0].mxu0
    %v591 = vadd.f32 0.0, %v590
    %v592 = vpop.f32.mrb[0].mxu0
    %v593 = vadd.f32 0.0, %v592
    %v594 = vpop.f32.mrb[0].mxu0
    %v595 = vpop.f32.mrb[0].mxu0
    %596 = vdwg.mxu0
    %v599 = vrot.slane %v591, 2
    %v600 = vrot.slane %v593, 2
    %v603 = vadd.f32 %v244, %v599
    %v604 = vadd.f32 %v246, %v600
    %v605 = vxor.u32 %v603, 2147483648
    %v606 = vxor.u32 %v604, 2147483648
    %v607 = vmul.f32 %v605, 1.442695
    %v608 = vpow.pop %v607
    %v609 = vmul.f32 %v606, 1.442695
    %v610 = vpow.pop %v609
    %v611 = vadd.f32 %v608, 1.0
    %v612 = vadd.f32 %v610, 1.0
    %v613 = vrcp.pop %v611
    %v614 = vmul.f32 1.0, %v613
    %v615 = vrcp.pop %v612
    %v616 = vmul.f32 1.0, %v615
    %v617 = vtanh.pop %v604
    %v619 = vrot.slane %v543, 6
    %v621 = vmul.f32 %v614, %v619
    %623 = vrot.lane.b32.xlu0 %v617, 64
    %v624 = vpop.permute.xlu0 %623
    %v626 = vmul.f32 %v614, %v624
    %628 = vrot.lane.b32.xlu0 %v626, 64
    %v629 = vpop.permute.xlu0 %628
    %v631 = vadd.f32 %v621, %v629
    %v632 = vtanh.pop %v631
    %634 = vrot.lane.b32.xlu0 %v632, 64
    %v635 = vpop.permute.xlu0 %634
    %v637 = vmul.f32 %v616, %v635
    %v638 = vpack.c.bf16 %v637, %v637
    %v640 = vrot.slane %v638, 3
    %v642 = vsel %vm205, %v640, 0
    %644 = vmatprep.subr.bf16.mxu0 %v285
    %645 = vmatpush1.bf16.msra.mxu0 %v284
    %646 = vmatprep.subr.bf16.mxu0 %v287
    %647 = vmatpush1.bf16.msra.mxu0 %v286
    %648 = vmatprep.subr.bf16.mxu0 %v289
    %649 = vmatpush1.bf16.msra.mxu0 %v288
    %650 = vmatprep.subr.bf16.mxu0 %v291
    %651 = vmatpush1.bf16.msra.mxu0 %v290
    %652 = vmatprep.subr.bf16.mxu0 0
    %653 = vmatpush1.bf16.msra.mxu0 0
    %654 = vmatprep.subr.bf16.mxu0 0
    %655 = vmatpush1.bf16.msra.mxu0 0
    %656 = vmatprep.subr.bf16.mxu0 0
    %657 = vmatpush1.bf16.msra.mxu0 0
    %658 = vmatprep.subr.bf16.mxu0 0
    %659 = vmatpush1.bf16.msra.mxu0 0
    %660 = vmatprep.subr.bf16.mxu0 0
    %661 = vmatpush1.bf16.msra.mxu0 0
    %662 = vmatprep.subr.bf16.mxu0 0
    %663 = vmatpush1.bf16.msra.mxu0 0
    %664 = vmatprep.subr.bf16.mxu0 0
    %665 = vmatpush1.bf16.msra.mxu0 0
    %666 = vmatprep.subr.bf16.mxu0 0
    %667 = vmatpush1.bf16.msra.mxu0 0
    %668 = vmatprep.subr.bf16.mxu0 0
    %669 = vmatpush1.bf16.msra.mxu0 0
    %670 = vmatprep.subr.bf16.mxu0 0
    %671 = vmatpush1.bf16.msra.mxu0 0
    %672 = vmatprep.subr.bf16.mxu0 0
    %673 = vmatpush1.bf16.msra.mxu0 0
    %674 = vmatprep.subr.bf16.mxu0 0
    %675 = vmatpush1.bf16.msra.mxu0 0
    %676 = vmatprep.mubr.bf16.mxu0 0
    %677 = vmatmul.mubr.bf16.gmra.mrb[0].mxu0 %v642
    %v678 = vpop.f32.mrb[0].mxu0
    %v679 = vadd.f32 0.0, %v678
    %v680 = vpop.f32.mrb[0].mxu0
    %v681 = vadd.f32 0.0, %v680
    %v682 = vpop.f32.mrb[0].mxu0
    %v683 = vpop.f32.mrb[0].mxu0
    %684 = vdwg.mxu0
    %v685 = vadd.f32 %v248, %v679
    %v686 = vadd.f32 %v250, %v681
    %v687 = vxor.u32 %v685, 2147483648
    %v688 = vxor.u32 %v686, 2147483648
    %v689 = vmul.f32 %v687, 1.442695
    %v690 = vpow.pop %v689
    %v691 = vmul.f32 %v688, 1.442695
    %v692 = vpow.pop %v691
    %v693 = vadd.f32 %v690, 1.0
    %v694 = vadd.f32 %v692, 1.0
    %v695 = vrcp.pop %v693
    %v696 = vmul.f32 1.0, %v695
    %v697 = vrcp.pop %v694
    %v698 = vmul.f32 1.0, %v697
    %v699 = vtanh.pop %v686
    %v701 = vrot.slane %v631, 6
    %v703 = vmul.f32 %v696, %v701
    %705 = vrot.lane.b32.xlu0 %v699, 64
    %v706 = vpop.permute.xlu0 %705
    %v708 = vmul.f32 %v696, %v706
    %710 = vrot.lane.b32.xlu0 %v708, 64
    %v711 = vpop.permute.xlu0 %710
    %v713 = vadd.f32 %v703, %v711
    %v714 = vtanh.pop %v713
    %716 = vrot.lane.b32.xlu0 %v714, 64
    %v717 = vpop.permute.xlu0 %716
    %v719 = vmul.f32 %v698, %v717
    %v720 = vpack.c.bf16 %v719, %v719
    %v722 = vsel %vm205, %v720, 0
    %724 = vmatprep.subr.bf16.mxu0 %v285
    %725 = vmatpush1.bf16.msra.mxu0 %v284
    %726 = vmatprep.subr.bf16.mxu0 %v287
    %727 = vmatpush1.bf16.msra.mxu0 %v286
    %728 = vmatprep.subr.bf16.mxu0 %v289
    %729 = vmatpush1.bf16.msra.mxu0 %v288
    %730 = vmatprep.subr.bf16.mxu0 %v291
    %731 = vmatpush1.bf16.msra.mxu0 %v290
    %732 = vmatprep.subr.bf16.mxu0 0
    %733 = vmatpush1.bf16.msra.mxu0 0
    %734 = vmatprep.subr.bf16.mxu0 0
    %735 = vmatpush1.bf16.msra.mxu0 0
    %736 = vmatprep.subr.bf16.mxu0 0
    %737 = vmatpush1.bf16.msra.mxu0 0
    %738 = vmatprep.subr.bf16.mxu0 0
    %739 = vmatpush1.bf16.msra.mxu0 0
    %740 = vmatprep.subr.bf16.mxu0 0
    %741 = vmatpush1.bf16.msra.mxu0 0
    %742 = vmatprep.subr.bf16.mxu0 0
    %743 = vmatpush1.bf16.msra.mxu0 0
    %744 = vmatprep.subr.bf16.mxu0 0
    %745 = vmatpush1.bf16.msra.mxu0 0
    %746 = vmatprep.subr.bf16.mxu0 0
    %747 = vmatpush1.bf16.msra.mxu0 0
    %748 = vmatprep.subr.bf16.mxu0 0
    %749 = vmatpush1.bf16.msra.mxu0 0
    %750 = vmatprep.subr.bf16.mxu0 0
    %751 = vmatpush1.bf16.msra.mxu0 0
    %752 = vmatprep.subr.bf16.mxu0 0
    %753 = vmatpush1.bf16.msra.mxu0 0
    %754 = vmatprep.subr.bf16.mxu0 0
    %755 = vmatpush1.bf16.msra.mxu0 0
    %756 = vmatprep.mubr.bf16.mxu0 0
    %757 = vmatmul.mubr.bf16.gmra.mrb[0].mxu0 %v722
    %v758 = vpop.f32.mrb[0].mxu0
    %v759 = vadd.f32 0.0, %v758
    %v760 = vpop.f32.mrb[0].mxu0
    %v761 = vadd.f32 0.0, %v760
    %v762 = vpop.f32.mrb[0].mxu0
    %v763 = vpop.f32.mrb[0].mxu0
    %764 = vdwg.mxu0
    %v767 = vrot.slane %v759, 6
    %v768 = vrot.slane %v761, 6
    %v771 = vadd.f32 %v248, %v767
    %v772 = vadd.f32 %v250, %v768
    %v773 = vxor.u32 %v771, 2147483648
    %v774 = vxor.u32 %v772, 2147483648
    %v775 = vmul.f32 %v773, 1.442695
    %v776 = vpow.pop %v775
    %v777 = vmul.f32 %v774, 1.442695
    %v778 = vpow.pop %v777
    %v779 = vadd.f32 %v776, 1.0
    %v780 = vadd.f32 %v778, 1.0
    %v781 = vrcp.pop %v779
    %v782 = vmul.f32 1.0, %v781
    %v783 = vrcp.pop %v780
    %v784 = vmul.f32 1.0, %v783
    %v785 = vtanh.pop %v772
    %v787 = vrot.slane %v713, 6
    %v789 = vmul.f32 %v782, %v787
    %791 = vrot.lane.b32.xlu0 %v785, 64
    %v792 = vpop.permute.xlu0 %791
    %v794 = vmul.f32 %v782, %v792
    %796 = vrot.lane.b32.xlu0 %v794, 64
    %v797 = vpop.permute.xlu0 %796
    %v799 = vadd.f32 %v789, %v797
    %v800 = vtanh.pop %v799
    %802 = vrot.lane.b32.xlu0 %v800, 64
    %v803 = vpop.permute.xlu0 %802
    %v805 = vmul.f32 %v784, %v803
    %v806 = vpack.c.bf16 %v805, %v805
    %v808 = vrot.slane %v806, 1
    %v810 = vsel %vm205, %v808, 0
    %812 = vmatprep.subr.bf16.mxu0 %v285
    %813 = vmatpush1.bf16.msra.mxu0 %v284
    %814 = vmatprep.subr.bf16.mxu0 %v287
    %815 = vmatpush1.bf16.msra.mxu0 %v286
    %816 = vmatprep.subr.bf16.mxu0 %v289
    %817 = vmatpush1.bf16.msra.mxu0 %v288
    %818 = vmatprep.subr.bf16.mxu0 %v291
    %819 = vmatpush1.bf16.msra.mxu0 %v290
    %820 = vmatprep.subr.bf16.mxu0 0
    %821 = vmatpush1.bf16.msra.mxu0 0
    %822 = vmatprep.subr.bf16.mxu0 0
    %823 = vmatpush1.bf16.msra.mxu0 0
    %824 = vmatprep.subr.bf16.mxu0 0
    %825 = vmatpush1.bf16.msra.mxu0 0
    %826 = vmatprep.subr.bf16.mxu0 0
    %827 = vmatpush1.bf16.msra.mxu0 0
    %828 = vmatprep.subr.bf16.mxu0 0
    %829 = vmatpush1.bf16.msra.mxu0 0
    %830 = vmatprep.subr.bf16.mxu0 0
    %831 = vmatpush1.bf16.msra.mxu0 0
    %832 = vmatprep.subr.bf16.mxu0 0
    %833 = vmatpush1.bf16.msra.mxu0 0
    %834 = vmatprep.subr.bf16.mxu0 0
    %835 = vmatpush1.bf16.msra.mxu0 0
    %836 = vmatprep.subr.bf16.mxu0 0
    %837 = vmatpush1.bf16.msra.mxu0 0
    %838 = vmatprep.subr.bf16.mxu0 0
    %839 = vmatpush1.bf16.msra.mxu0 0
    %840 = vmatprep.subr.bf16.mxu0 0
    %841 = vmatpush1.bf16.msra.mxu0 0
    %842 = vmatprep.subr.bf16.mxu0 0
    %843 = vmatpush1.bf16.msra.mxu0 0
    %844 = vmatprep.mubr.bf16.mxu0 0
    %845 = vmatmul.mubr.bf16.gmra.mrb[0].mxu0 %v810
    %v846 = vpop.f32.mrb[0].mxu0
    %v847 = vadd.f32 0.0, %v846
    %v848 = vpop.f32.mrb[0].mxu0
    %v849 = vadd.f32 0.0, %v848
    %v850 = vpop.f32.mrb[0].mxu0
    %v851 = vpop.f32.mrb[0].mxu0
    %852 = vdwg.mxu0
    %v855 = vrot.slane %v847, 4
    %v856 = vrot.slane %v849, 4
    %v859 = vadd.f32 %v248, %v855
    %v860 = vadd.f32 %v250, %v856
    %v861 = vxor.u32 %v859, 2147483648
    %v862 = vxor.u32 %v860, 2147483648
    %v863 = vmul.f32 %v861, 1.442695
    %v864 = vpow.pop %v863
    %v865 = vmul.f32 %v862, 1.442695
    %v866 = vpow.pop %v865
    %v867 = vadd.f32 %v864, 1.0
    %v868 = vadd.f32 %v866, 1.0
    %v869 = vrcp.pop %v867
    %v870 = vmul.f32 1.0, %v869
    %v871 = vrcp.pop %v868
    %v872 = vmul.f32 1.0, %v871
    %v873 = vtanh.pop %v860
    %v875 = vrot.slane %v799, 6
    %v877 = vmul.f32 %v870, %v875
    %879 = vrot.lane.b32.xlu0 %v873, 64
    %v880 = vpop.permute.xlu0 %879
    %v882 = vmul.f32 %v870, %v880
    %884 = vrot.lane.b32.xlu0 %v882, 64
    %v885 = vpop.permute.xlu0 %884
    %v887 = vadd.f32 %v877, %v885
    %v888 = vtanh.pop %v887
    %890 = vrot.lane.b32.xlu0 %v888, 64
    %v891 = vpop.permute.xlu0 %890
    %v893 = vmul.f32 %v872, %v891
    %v894 = vpack.c.bf16 %v893, %v893
    %v896 = vrot.slane %v894, 2
    %v898 = vsel %vm205, %v896, 0
    %900 = vmatprep.subr.bf16.mxu0 %v285
    %901 = vmatpush1.bf16.msra.mxu0 %v284
    %902 = vmatprep.subr.bf16.mxu0 %v287
    %903 = vmatpush1.bf16.msra.mxu0 %v286
    %904 = vmatprep.subr.bf16.mxu0 %v289
    %905 = vmatpush1.bf16.msra.mxu0 %v288
    %906 = vmatprep.subr.bf16.mxu0 %v291
    %907 = vmatpush1.bf16.msra.mxu0 %v290
    %908 = vmatprep.subr.bf16.mxu0 0
    %909 = vmatpush1.bf16.msra.mxu0 0
    %910 = vmatprep.subr.bf16.mxu0 0
    %911 = vmatpush1.bf16.msra.mxu0 0
    %912 = vmatprep.subr.bf16.mxu0 0
    %913 = vmatpush1.bf16.msra.mxu0 0
    %914 = vmatprep.subr.bf16.mxu0 0
    %915 = vmatpush1.bf16.msra.mxu0 0
    %916 = vmatprep.subr.bf16.mxu0 0
    %917 = vmatpush1.bf16.msra.mxu0 0
    %918 = vmatprep.subr.bf16.mxu0 0
    %919 = vmatpush1.bf16.msra.mxu0 0
    %920 = vmatprep.subr.bf16.mxu0 0
    %921 = vmatpush1.bf16.msra.mxu0 0
    %922 = vmatprep.subr.bf16.mxu0 0
    %923 = vmatpush1.bf16.msra.mxu0 0
    %924 = vmatprep.subr.bf16.mxu0 0
    %925 = vmatpush1.bf16.msra.mxu0 0
    %926 = vmatprep.subr.bf16.mxu0 0
    %927 = vmatpush1.bf16.msra.mxu0 0
    %928 = vmatprep.subr.bf16.mxu0 0
    %929 = vmatpush1.bf16.msra.mxu0 0
    %930 = vmatprep.subr.bf16.mxu0 0
    %931 = vmatpush1.bf16.msra.mxu0 0
    %932 = vmatprep.mubr.bf16.mxu0 0
    %933 = vmatmul.mubr.bf16.gmra.mrb[0].mxu0 %v898
    %v934 = vpop.f32.mrb[0].mxu0
    %v935 = vadd.f32 0.0, %v934
    %v936 = vpop.f32.mrb[0].mxu0
    %v937 = vadd.f32 0.0, %v936
    %v938 = vpop.f32.mrb[0].mxu0
    %v939 = vpop.f32.mrb[0].mxu0
    %940 = vdwg.mxu0
    %v943 = vrot.slane %v935, 2
    %v944 = vrot.slane %v937, 2
    %v947 = vadd.f32 %v248, %v943
    %v948 = vadd.f32 %v250, %v944
    %v949 = vxor.u32 %v947, 2147483648
    %v950 = vxor.u32 %v948, 2147483648
    %v951 = vmul.f32 %v949, 1.442695
    %v952 = vpow.pop %v951
    %v953 = vmul.f32 %v950, 1.442695
    %v954 = vpow.pop %v953
    %v955 = vadd.f32 %v952, 1.0
    %v956 = vadd.f32 %v954, 1.0
    %v957 = vrcp.pop %v955
    %v958 = vmul.f32 1.0, %v957
    %v959 = vrcp.pop %v956
    %v960 = vmul.f32 1.0, %v959
    %v961 = vtanh.pop %v948
    %v963 = vrot.slane %v887, 6
    %v965 = vmul.f32 %v958, %v963
    %967 = vrot.lane.b32.xlu0 %v961, 64
    %v968 = vpop.permute.xlu0 %967
    %v970 = vmul.f32 %v958, %v968
    %972 = vrot.lane.b32.xlu0 %v970, 64
    %v973 = vpop.permute.xlu0 %972
    %v975 = vadd.f32 %v965, %v973
    %v976 = vtanh.pop %v975
    %978 = vrot.lane.b32.xlu0 %v976, 64
    %v979 = vpop.permute.xlu0 %978
    %v981 = vmul.f32 %v960, %v979
    %v982 = vpack.c.bf16 %v981, %v981
    %v983 = vld [vmem:[%s7] sm:$0xff]
    %v984 = vld [vmem:[%s7 + $0x8] sm:$0xff]
    %v985 = vld [vmem:[%s7 + $0x10] sm:$0xff]
    %v986 = vld [vmem:[%s7 + $0x18] sm:$0xff]
    %v987 = vld [vmem:[%s7 + $0x20] sm:$0xff]
    %v988 = vld [vmem:[%s7 + $0x28] sm:$0xff]
    %v989 = vld [vmem:[%s7 + $0x30] sm:$0xff]
    %v990 = vld [vmem:[%s7 + $0x38] sm:$0xff]
    %v991 = vld [vmem:[%s7 + $0x40] sm:$0xff]
    %v992 = vld [vmem:[%s7 + $0x48] sm:$0xff]
    %v993 = vld [vmem:[%s7 + $0x50] sm:$0xff]
    %v994 = vld [vmem:[%s7 + $0x58] sm:$0xff]
    %v995 = vld [vmem:[%s7 + $0x60] sm:$0xff]
    %v996 = vld [vmem:[%s7 + $0x68] sm:$0xff]
    %v997 = vld [vmem:[%s7 + $0x70] sm:$0xff]
    %v998 = vld [vmem:[%s7 + $0x78] sm:$0xff]
    %v999 = vld [vmem:[%s9] sm:$0xf]
    %v1001 = vlaneseq
    %v1002 = vshrl.u32 %v1001, 7
    %v1003 = vsub.s32 0, %v1002
    %v1004 = vrot.slane %v999, %v1003
    %v1005 = vlaneseq
    %v1006 = vshrl.u32 %v1005, 7
    %v1007 = vsub.s32 1, %v1006
    %v1008 = vrot.slane %v999, %v1007
    %v1009 = vlaneseq
    %v1010 = vshrl.u32 %v1009, 7
    %v1011 = vsub.s32 2, %v1010
    %v1012 = vrot.slane %v999, %v1011
    %v1013 = vlaneseq
    %v1014 = vshrl.u32 %v1013, 7
    %v1015 = vsub.s32 3, %v1014
    %v1016 = vrot.slane %v999, %v1015
    %v1022 = vrot.slane %v982, 3
    %v1039 = vunpack.c.l.b16 %v983
    %v1040 = vunpack.c.h.b16 %v983
    %v1041 = vunpack.c.l.b16 %v984
    %v1042 = vunpack.c.h.b16 %v984
    %v1043 = vunpack.c.l.b16 %v985
    %v1044 = vunpack.c.h.b16 %v985
    %v1045 = vunpack.c.l.b16 %v986
    %v1046 = vunpack.c.h.b16 %v986
    %v1047 = vunpack.c.l.b16 %v987
    %v1048 = vunpack.c.h.b16 %v987
    %v1049 = vunpack.c.l.b16 %v988
    %v1050 = vunpack.c.h.b16 %v988
    %v1051 = vunpack.c.l.b16 %v989
    %v1052 = vunpack.c.h.b16 %v989
    %v1053 = vunpack.c.l.b16 %v990
    %v1054 = vunpack.c.h.b16 %v990
    %v1055 = vunpack.c.l.b16 %v991
    %v1056 = vunpack.c.h.b16 %v991
    %v1057 = vunpack.c.l.b16 %v992
    %v1058 = vunpack.c.h.b16 %v992
    %v1059 = vunpack.c.l.b16 %v993
    %v1060 = vunpack.c.h.b16 %v993
    %v1061 = vunpack.c.l.b16 %v994
    %v1062 = vunpack.c.h.b16 %v994
    %v1063 = vunpack.c.l.b16 %v995
    %v1064 = vunpack.c.h.b16 %v995
    %v1065 = vunpack.c.l.b16 %v996
    %v1066 = vunpack.c.h.b16 %v996
    %v1067 = vunpack.c.l.b16 %v997
    %v1068 = vunpack.c.h.b16 %v997
    %v1069 = vunpack.c.l.b16 %v998
    %v1070 = vunpack.c.h.b16 %v998
    %v1071 = vpack.c.b16 %v1043, %v1039
    %v1072 = vpack.c.b16 %v1044, %v1040
    %v1073 = vpack.c.b16 %v1045, %v1041
    %v1074 = vpack.c.b16 %v1046, %v1042
    %v1075 = vpack.c.b16 %v1051, %v1047
    %v1076 = vpack.c.b16 %v1052, %v1048
    %v1077 = vpack.c.b16 %v1053, %v1049
    %v1078 = vpack.c.b16 %v1054, %v1050
    %v1079 = vpack.c.b16 %v1059, %v1055
    %v1080 = vpack.c.b16 %v1060, %v1056
    %v1081 = vpack.c.b16 %v1061, %v1057
    %v1082 = vpack.c.b16 %v1062, %v1058
    %v1083 = vpack.c.b16 %v1067, %v1063
    %v1084 = vpack.c.b16 %v1068, %v1064
    %v1085 = vpack.c.b16 %v1069, %v1065
    %v1086 = vpack.c.b16 %v1070, %v1066
    %v1104 = vsel %vm205, %v1022, 0
    %1106 = vmatprep.subr.bf16.mxu0 %v1072
    %1107 = vmatpush1.bf16.msra.mxu0 %v1071
    %1108 = vmatprep.subr.bf16.mxu0 %v1076
    %1109 = vmatpush1.bf16.msra.mxu0 %v1075
    %1110 = vmatprep.subr.bf16.mxu0 %v1080
    %1111 = vmatpush1.bf16.msra.mxu0 %v1079
    %1112 = vmatprep.subr.bf16.mxu0 %v1084
    %1113 = vmatpush1.bf16.msra.mxu0 %v1083
    %1114 = vmatprep.subr.bf16.mxu0 0
    %1115 = vmatpush1.bf16.msra.mxu0 0
    %1116 = vmatprep.subr.bf16.mxu0 0
    %1117 = vmatpush1.bf16.msra.mxu0 0
    %1118 = vmatprep.subr.bf16.mxu0 0
    %1119 = vmatpush1.bf16.msra.mxu0 0
    %1120 = vmatprep.subr.bf16.mxu0 0
    %1121 = vmatpush1.bf16.msra.mxu0 0
    %1122 = vmatprep.subr.bf16.mxu0 0
    %1123 = vmatpush1.bf16.msra.mxu0 0
    %1124 = vmatprep.subr.bf16.mxu0 0
    %1125 = vmatpush1.bf16.msra.mxu0 0
    %1126 = vmatprep.subr.bf16.mxu0 0
    %1127 = vmatpush1.bf16.msra.mxu0 0
    %1128 = vmatprep.subr.bf16.mxu0 0
    %1129 = vmatpush1.bf16.msra.mxu0 0
    %1130 = vmatprep.subr.bf16.mxu0 0
    %1131 = vmatpush1.bf16.msra.mxu0 0
    %1132 = vmatprep.subr.bf16.mxu0 0
    %1133 = vmatpush1.bf16.msra.mxu0 0
    %1134 = vmatprep.subr.bf16.mxu0 0
    %1135 = vmatpush1.bf16.msra.mxu0 0
    %1136 = vmatprep.subr.bf16.mxu0 0
    %1137 = vmatpush1.bf16.msra.mxu0 0
    %1138 = vmatprep.mubr.bf16.mxu0 0
    %1139 = vmatmul.mubr.bf16.gmra.mrb[0].mxu0 %v1104
    %v1140 = vpop.f32.mrb[0].mxu0
    %v1141 = vadd.f32 %v1004, %v1140
    %v1142 = vpop.f32.mrb[0].mxu0
    %v1143 = vadd.f32 %v1008, %v1142
    %v1144 = vpop.f32.mrb[0].mxu0
    %v1145 = vpop.f32.mrb[0].mxu0
    %1146 = vdwg.mxu0
    %1147 = vmatprep.subr.bf16.mxu0 %v1074
    %1148 = vmatpush1.bf16.msra.mxu0 %v1073
    %1149 = vmatprep.subr.bf16.mxu0 %v1078
    %1150 = vmatpush1.bf16.msra.mxu0 %v1077
    %1151 = vmatprep.subr.bf16.mxu0 %v1082
    %1152 = vmatpush1.bf16.msra.mxu0 %v1081
    %1153 = vmatprep.subr.bf16.mxu0 %v1086
    %1154 = vmatpush1.bf16.msra.mxu0 %v1085
    %1155 = vmatprep.subr.bf16.mxu0 0
    %1156 = vmatpush1.bf16.msra.mxu0 0
    %1157 = vmatprep.subr.bf16.mxu0 0
    %1158 = vmatpush1.bf16.msra.mxu0 0
    %1159 = vmatprep.subr.bf16.mxu0 0
    %1160 = vmatpush1.bf16.msra.mxu0 0
    %1161 = vmatprep.subr.bf16.mxu0 0
    %1162 = vmatpush1.bf16.msra.mxu0 0
    %1163 = vmatprep.subr.bf16.mxu0 0
    %1164 = vmatpush1.bf16.msra.mxu0 0
    %1165 = vmatprep.subr.bf16.mxu0 0
    %1166 = vmatpush1.bf16.msra.mxu0 0
    %1167 = vmatprep.subr.bf16.mxu0 0
    %1168 = vmatpush1.bf16.msra.mxu0 0
    %1169 = vmatprep.subr.bf16.mxu0 0
    %1170 = vmatpush1.bf16.msra.mxu0 0
    %1171 = vmatprep.subr.bf16.mxu0 0
    %1172 = vmatpush1.bf16.msra.mxu0 0
    %1173 = vmatprep.subr.bf16.mxu0 0
    %1174 = vmatpush1.bf16.msra.mxu0 0
    %1175 = vmatprep.subr.bf16.mxu0 0
    %1176 = vmatpush1.bf16.msra.mxu0 0
    %1177 = vmatprep.subr.bf16.mxu0 0
    %1178 = vmatpush1.bf16.msra.mxu0 0
    %1179 = vmatprep.mubr.bf16.mxu0 0
    %1180 = vmatmul.mubr.bf16.gmra.mrb[0].mxu0 %v1104
    %v1181 = vpop.f32.mrb[0].mxu0
    %v1182 = vadd.f32 %v1012, %v1181
    %v1183 = vpop.f32.mrb[0].mxu0
    %v1184 = vadd.f32 %v1016, %v1183
    %v1185 = vpop.f32.mrb[0].mxu0
    %v1186 = vpop.f32.mrb[0].mxu0
    %1187 = vdwg.mxu0
    %v1188 = vld [vmem:[#allocation6] sm:$0xff]
    %v1189 = vld [vmem:[#allocation6 + $0x8] sm:$0xff]
    %v1190 = vld [vmem:[#allocation6 + $0x10] sm:$0xff]
    %v1191 = vld [vmem:[#allocation6 + $0x18] sm:$0xff]
    %v1192 = vld [vmem:[#allocation6 + $0x20] sm:$0xff]
    %v1193 = vld [vmem:[#allocation6 + $0x28] sm:$0xff]
    %v1194 = vld [vmem:[#allocation6 + $0x30] sm:$0xff]
    %v1195 = vld [vmem:[#allocation6 + $0x38] sm:$0xff]
    %v1196 = vld [vmem:[#allocation6 + $0x40] sm:$0xff]
    %v1197 = vld [vmem:[#allocation6 + $0x48] sm:$0xff]
    %v1198 = vld [vmem:[#allocation6 + $0x50] sm:$0xff]
    %v1199 = vld [vmem:[#allocation6 + $0x58] sm:$0xff]
    %v1200 = vld [vmem:[#allocation6 + $0x60] sm:$0xff]
    %v1201 = vld [vmem:[#allocation6 + $0x68] sm:$0xff]
    %v1202 = vld [vmem:[#allocation6 + $0x70] sm:$0xff]
    %v1203 = vld [vmem:[#allocation6 + $0x78] sm:$0xff]
    %v1204 = vld [vmem:[#allocation6 + $0x80] sm:$0xff]
    %v1205 = vld [vmem:[#allocation6 + $0x88] sm:$0xff]
    %v1206 = vld [vmem:[#allocation6 + $0x90] sm:$0xff]
    %v1207 = vld [vmem:[#allocation6 + $0x98] sm:$0xff]
    %v1208 = vld [vmem:[#allocation6 + $0xa0] sm:$0xff]
    %v1209 = vld [vmem:[#allocation6 + $0xa8] sm:$0xff]
    %v1210 = vld [vmem:[#allocation6 + $0xb0] sm:$0xff]
    %v1211 = vld [vmem:[#allocation6 + $0xb8] sm:$0xff]
    %v1212 = vld [vmem:[#allocation6 + $0xc0] sm:$0xff]
    %v1213 = vld [vmem:[#allocation6 + $0xc8] sm:$0xff]
    %v1214 = vld [vmem:[#allocation6 + $0xd0] sm:$0xff]
    %v1215 = vld [vmem:[#allocation6 + $0xd8] sm:$0xff]
    %v1216 = vld [vmem:[#allocation6 + $0xe0] sm:$0xff]
    %v1217 = vld [vmem:[#allocation6 + $0xe8] sm:$0xff]
    %v1218 = vld [vmem:[#allocation6 + $0xf0] sm:$0xff]
    %v1219 = vld [vmem:[#allocation6 + $0xf8] sm:$0xff]
    %v1252 = vunpack.c.l.b16 %v1188
    %v1253 = vunpack.c.h.b16 %v1188
    %v1254 = vunpack.c.l.b16 %v1189
    %v1255 = vunpack.c.h.b16 %v1189
    %v1256 = vunpack.c.l.b16 %v1190
    %v1257 = vunpack.c.h.b16 %v1190
    %v1258 = vunpack.c.l.b16 %v1191
    %v1259 = vunpack.c.h.b16 %v1191
    %v1260 = vunpack.c.l.b16 %v1192
    %v1261 = vunpack.c.h.b16 %v1192
    %v1262 = vunpack.c.l.b16 %v1193
    %v1263 = vunpack.c.h.b16 %v1193
    %v1264 = vunpack.c.l.b16 %v1194
    %v1265 = vunpack.c.h.b16 %v1194
    %v1266 = vunpack.c.l.b16 %v1195
    %v1267 = vunpack.c.h.b16 %v1195
    %v1268 = vunpack.c.l.b16 %v1196
    %v1269 = vunpack.c.h.b16 %v1196
    %v1270 = vunpack.c.l.b16 %v1197
    %v1271 = vunpack.c.h.b16 %v1197
    %v1272 = vunpack.c.l.b16 %v1198
    %v1273 = vunpack.c.h.b16 %v1198
    %v1274 = vunpack.c.l.b16 %v1199
    %v1275 = vunpack.c.h.b16 %v1199
    %v1276 = vunpack.c.l.b16 %v1200
    %v1277 = vunpack.c.h.b16 %v1200
    %v1278 = vunpack.c.l.b16 %v1201
    %v1279 = vunpack.c.h.b16 %v1201
    %v1280 = vunpack.c.l.b16 %v1202
    %v1281 = vunpack.c.h.b16 %v1202
    %v1282 = vunpack.c.l.b16 %v1203
    %v1283 = vunpack.c.h.b16 %v1203
    %v1284 = vunpack.c.l.b16 %v1204
    %v1285 = vunpack.c.h.b16 %v1204
    %v1286 = vunpack.c.l.b16 %v1205
    %v1287 = vunpack.c.h.b16 %v1205
    %v1288 = vunpack.c.l.b16 %v1206
    %v1289 = vunpack.c.h.b16 %v1206
    %v1290 = vunpack.c.l.b16 %v1207
    %v1291 = vunpack.c.h.b16 %v1207
    %v1292 = vunpack.c.l.b16 %v1208
    %v1293 = vunpack.c.h.b16 %v1208
    %v1294 = vunpack.c.l.b16 %v1209
    %v1295 = vunpack.c.h.b16 %v1209
    %v1296 = vunpack.c.l.b16 %v1210
    %v1297 = vunpack.c.h.b16 %v1210
    %v1298 = vunpack.c.l.b16 %v1211
    %v1299 = vunpack.c.h.b16 %v1211
    %v1300 = vunpack.c.l.b16 %v1212
    %v1301 = vunpack.c.h.b16 %v1212
    %v1302 = vunpack.c.l.b16 %v1213
    %v1303 = vunpack.c.h.b16 %v1213
    %v1304 = vunpack.c.l.b16 %v1214
    %v1305 = vunpack.c.h.b16 %v1214
    %v1306 = vunpack.c.l.b16 %v1215
    %v1307 = vunpack.c.h.b16 %v1215
    %v1308 = vunpack.c.l.b16 %v1216
    %v1309 = vunpack.c.h.b16 %v1216
    %v1310 = vunpack.c.l.b16 %v1217
    %v1311 = vunpack.c.h.b16 %v1217
    %v1312 = vunpack.c.l.b16 %v1218
    %v1313 = vunpack.c.h.b16 %v1218
    %v1314 = vunpack.c.l.b16 %v1219
    %v1315 = vunpack.c.h.b16 %v1219
    %v1316 = vpack.c.b16 %v1256, %v1252
    %v1317 = vpack.c.b16 %v1257, %v1253
    %v1318 = vpack.c.b16 %v1258, %v1254
    %v1319 = vpack.c.b16 %v1259, %v1255
    %v1320 = vpack.c.b16 %v1264, %v1260
    %v1321 = vpack.c.b16 %v1265, %v1261
    %v1322 = vpack.c.b16 %v1266, %v1262
    %v1323 = vpack.c.b16 %v1267, %v1263
    %v1324 = vpack.c.b16 %v1272, %v1268
    %v1325 = vpack.c.b16 %v1273, %v1269
    %v1326 = vpack.c.b16 %v1274, %v1270
    %v1327 = vpack.c.b16 %v1275, %v1271
    %v1328 = vpack.c.b16 %v1280, %v1276
    %v1329 = vpack.c.b16 %v1281, %v1277
    %v1330 = vpack.c.b16 %v1282, %v1278
    %v1331 = vpack.c.b16 %v1283, %v1279
    %v1332 = vpack.c.b16 %v1288, %v1284
    %v1333 = vpack.c.b16 %v1289, %v1285
    %v1334 = vpack.c.b16 %v1290, %v1286
    %v1335 = vpack.c.b16 %v1291, %v1287
    %v1336 = vpack.c.b16 %v1296, %v1292
    %v1337 = vpack.c.b16 %v1297, %v1293
    %v1338 = vpack.c.b16 %v1298, %v1294
    %v1339 = vpack.c.b16 %v1299, %v1295
    %v1340 = vpack.c.b16 %v1304, %v1300
    %v1341 = vpack.c.b16 %v1305, %v1301
    %v1342 = vpack.c.b16 %v1306, %v1302
    %v1343 = vpack.c.b16 %v1307, %v1303
    %v1344 = vpack.c.b16 %v1312, %v1308
    %v1345 = vpack.c.b16 %v1313, %v1309
    %v1346 = vpack.c.b16 %v1314, %v1310
    %v1347 = vpack.c.b16 %v1315, %v1311
    %1380 = vmatprep.subr.bf16.mxu0 %v1317
    %1381 = vmatpush1.bf16.msra.mxu0 %v1316
    %1382 = vmatprep.subr.bf16.mxu0 %v1321
    %1383 = vmatpush1.bf16.msra.mxu0 %v1320
    %1384 = vmatprep.subr.bf16.mxu0 %v1325
    %1385 = vmatpush1.bf16.msra.mxu0 %v1324
    %1386 = vmatprep.subr.bf16.mxu0 %v1329
    %1387 = vmatpush1.bf16.msra.mxu0 %v1328
    %1388 = vmatprep.subr.bf16.mxu0 %v1333
    %1389 = vmatpush1.bf16.msra.mxu0 %v1332
    %1390 = vmatprep.subr.bf16.mxu0 %v1337
    %1391 = vmatpush1.bf16.msra.mxu0 %v1336
    %1392 = vmatprep.subr.bf16.mxu0 %v1341
    %1393 = vmatpush1.bf16.msra.mxu0 %v1340
    %1394 = vmatprep.subr.bf16.mxu0 %v1345
    %1395 = vmatpush1.bf16.msra.mxu0 %v1344
    %1396 = vmatprep.subr.bf16.mxu0 0
    %1397 = vmatpush1.bf16.msra.mxu0 0
    %1398 = vmatprep.subr.bf16.mxu0 0
    %1399 = vmatpush1.bf16.msra.mxu0 0
    %1400 = vmatprep.subr.bf16.mxu0 0
    %1401 = vmatpush1.bf16.msra.mxu0 0
    %1402 = vmatprep.subr.bf16.mxu0 0
    %1403 = vmatpush1.bf16.msra.mxu0 0
    %1404 = vmatprep.subr.bf16.mxu0 0
    %1405 = vmatpush1.bf16.msra.mxu0 0
    %1406 = vmatprep.subr.bf16.mxu0 0
    %1407 = vmatpush1.bf16.msra.mxu0 0
    %1408 = vmatprep.subr.bf16.mxu0 0
    %1409 = vmatpush1.bf16.msra.mxu0 0
    %1410 = vmatprep.subr.bf16.mxu0 0
    %1411 = vmatpush1.bf16.msra.mxu0 0
    %1412 = vmatprep.mubr.bf16.mxu0 0
    %1413 = vmatmul.mubr.bf16.gmra.mrb[0].mxu0 0
    %v1414 = vpop.f32.mrb[0].mxu0
    %v1415 = vadd.f32 0.0, %v1414
    %v1416 = vpop.f32.mrb[0].mxu0
    %v1417 = vadd.f32 0.0, %v1416
    %v1418 = vpop.f32.mrb[0].mxu0
    %v1419 = vpop.f32.mrb[0].mxu0
    %1420 = vdwg.mxu0
    %1421 = vmatprep.subr.bf16.mxu0 %v1319
    %1422 = vmatpush1.bf16.msra.mxu0 %v1318
    %1423 = vmatprep.subr.bf16.mxu0 %v1323
    %1424 = vmatpush1.bf16.msra.mxu0 %v1322
    %1425 = vmatprep.subr.bf16.mxu0 %v1327
    %1426 = vmatpush1.bf16.msra.mxu0 %v1326
    %1427 = vmatprep.subr.bf16.mxu0 %v1331
    %1428 = vmatpush1.bf16.msra.mxu0 %v1330
    %1429 = vmatprep.subr.bf16.mxu0 %v1335
    %1430 = vmatpush1.bf16.msra.mxu0 %v1334
    %1431 = vmatprep.subr.bf16.mxu0 %v1339
    %1432 = vmatpush1.bf16.msra.mxu0 %v1338
    %1433 = vmatprep.subr.bf16.mxu0 %v1343
    %1434 = vmatpush1.bf16.msra.mxu0 %v1342
    %1435 = vmatprep.subr.bf16.mxu0 %v1347
    %1436 = vmatpush1.bf16.msra.mxu0 %v1346
    %1437 = vmatprep.subr.bf16.mxu0 0
    %1438 = vmatpush1.bf16.msra.mxu0 0
    %1439 = vmatprep.subr.bf16.mxu0 0
    %1440 = vmatpush1.bf16.msra.mxu0 0
    %1441 = vmatprep.subr.bf16.mxu0 0
    %1442 = vmatpush1.bf16.msra.mxu0 0
    %1443 = vmatprep.subr.bf16.mxu0 0
    %1444 = vmatpush1.bf16.msra.mxu0 0
    %1445 = vmatprep.subr.bf16.mxu0 0
    %1446 = vmatpush1.bf16.msra.mxu0 0
    %1447 = vmatprep.subr.bf16.mxu0 0
    %1448 = vmatpush1.bf16.msra.mxu0 0
    %1449 = vmatprep.subr.bf16.mxu0 0
    %1450 = vmatpush1.bf16.msra.mxu0 0
    %1451 = vmatprep.subr.bf16.mxu0 0
    %1452 = vmatpush1.bf16.msra.mxu0 0
    %1453 = vmatprep.mubr.bf16.mxu0 0
    %1454 = vmatmul.mubr.bf16.gmra.mrb[0].mxu0 0
    %v1455 = vpop.f32.mrb[0].mxu0
    %v1456 = vadd.f32 0.0, %v1455
    %v1457 = vpop.f32.mrb[0].mxu0
    %v1458 = vadd.f32 0.0, %v1457
    %v1459 = vpop.f32.mrb[0].mxu0
    %v1460 = vpop.f32.mrb[0].mxu0
    %1461 = vdwg.mxu0
    %v1462 = vadd.f32 %v1141, %v1415
    %v1463 = vadd.f32 %v1143, %v1417
    %v1464 = vadd.f32 %v1182, %v1456
    %v1465 = vadd.f32 %v1184, %v1458
    %v1466 = vxor.u32 %v1462, 2147483648
    %v1467 = vxor.u32 %v1463, 2147483648
    %v1468 = vxor.u32 %v1464, 2147483648
    %v1469 = vmul.f32 %v1466, 1.442695
    %v1470 = vpow.pop %v1469
    %v1471 = vmul.f32 %v1467, 1.442695
    %v1472 = vpow.pop %v1471
    %v1473 = vmul.f32 %v1468, 1.442695
    %v1474 = vpow.pop %v1473
    %v1475 = vadd.f32 %v1470, 1.0
    %v1476 = vadd.f32 %v1472, 1.0
    %v1477 = vadd.f32 %v1474, 1.0
    %v1478 = vrcp.pop %v1475
    %v1479 = vmul.f32 1.0, %v1478
    %v1480 = vrcp.pop %v1476
    %v1481 = vmul.f32 1.0, %v1480
    %v1482 = vrcp.pop %v1477
    %v1483 = vmul.f32 1.0, %v1482
    %v1484 = vtanh.pop %v1465
    %v1485 = vmul.f32 %v1481, 0.0
    %v1486 = vmul.f32 %v1479, %v1484
    %v1487 = vadd.f32 %v1485, %v1486
    %v1488 = vtanh.pop %v1487
    %v1489 = vmul.f32 %v1483, %v1488
    %v1490 = vpack.c.bf16 %v1489, %v1489
    %1491 = vmatprep.subr.bf16.mxu0 %v1317
    %1492 = vmatpush1.bf16.msra.mxu0 %v1316
    %1493 = vmatprep.subr.bf16.mxu0 %v1321
    %1494 = vmatpush1.bf16.msra.mxu0 %v1320
    %1495 = vmatprep.subr.bf16.mxu0 %v1325
    %1496 = vmatpush1.bf16.msra.mxu0 %v1324
    %1497 = vmatprep.subr.bf16.mxu0 %v1329
    %1498 = vmatpush1.bf16.msra.mxu0 %v1328
    %1499 = vmatprep.subr.bf16.mxu0 %v1333
    %1500 = vmatpush1.bf16.msra.mxu0 %v1332
    %1501 = vmatprep.subr.bf16.mxu0 %v1337
    %1502 = vmatpush1.bf16.msra.mxu0 %v1336
    %1503 = vmatprep.subr.bf16.mxu0 %v1341
    %1504 = vmatpush1.bf16.msra.mxu0 %v1340
    %1505 = vmatprep.subr.bf16.mxu0 %v1345
    %1506 = vmatpush1.bf16.msra.mxu0 %v1344
    %1507 = vmatprep.subr.bf16.mxu0 0
    %1508 = vmatpush1.bf16.msra.mxu0 0
    %1509 = vmatprep.subr.bf16.mxu0 0
    %1510 = vmatpush1.bf16.msra.mxu0 0
    %1511 = vmatprep.subr.bf16.mxu0 0
    %1512 = vmatpush1.bf16.msra.mxu0 0
    %1513 = vmatprep.subr.bf16.mxu0 0
    %1514 = vmatpush1.bf16.msra.mxu0 0
    %1515 = vmatprep.subr.bf16.mxu0 0
    %1516 = vmatpush1.bf16.msra.mxu0 0
    %1517 = vmatprep.subr.bf16.mxu0 0
    %1518 = vmatpush1.bf16.msra.mxu0 0
    %1519 = vmatprep.subr.bf16.mxu0 0
    %1520 = vmatpush1.bf16.msra.mxu0 0
    %1521 = vmatprep.subr.bf16.mxu0 0
    %1522 = vmatpush1.bf16.msra.mxu0 0
    %1523 = vmatprep.mubr.bf16.mxu0 0
    %1524 = vmatmul.mubr.bf16.gmra.mrb[0].mxu0 %v1490
    %v1525 = vpop.f32.mrb[0].mxu0
    %v1526 = vadd.f32 0.0, %v1525
    %v1527 = vpop.f32.mrb[0].mxu0
    %v1528 = vadd.f32 0.0, %v1527
    %v1529 = vpop.f32.mrb[0].mxu0
    %v1530 = vpop.f32.mrb[0].mxu0
    %1531 = vdwg.mxu0
    %1532 = vmatprep.subr.bf16.mxu0 %v1319
    %1533 = vmatpush1.bf16.msra.mxu0 %v1318
    %1534 = vmatprep.subr.bf16.mxu0 %v1323
    %1535 = vmatpush1.bf16.msra.mxu0 %v1322
    %1536 = vmatprep.subr.bf16.mxu0 %v1327
    %1537 = vmatpush1.bf16.msra.mxu0 %v1326
    %1538 = vmatprep.subr.bf16.mxu0 %v1331
    %1539 = vmatpush1.bf16.msra.mxu0 %v1330
    %1540 = vmatprep.subr.bf16.mxu0 %v1335
    %1541 = vmatpush1.bf16.msra.mxu0 %v1334
    %1542 = vmatprep.subr.bf16.mxu0 %v1339
    %1543 = vmatpush1.bf16.msra.mxu0 %v1338
    %1544 = vmatprep.subr.bf16.mxu0 %v1343
    %1545 = vmatpush1.bf16.msra.mxu0 %v1342
    %1546 = vmatprep.subr.bf16.mxu0 %v1347
    %1547 = vmatpush1.bf16.msra.mxu0 %v1346
    %1548 = vmatprep.subr.bf16.mxu0 0
    %1549 = vmatpush1.bf16.msra.mxu0 0
    %1550 = vmatprep.subr.bf16.mxu0 0
    %1551 = vmatpush1.bf16.msra.mxu0 0
    %1552 = vmatprep.subr.bf16.mxu0 0
    %1553 = vmatpush1.bf16.msra.mxu0 0
    %1554 = vmatprep.subr.bf16.mxu0 0
    %1555 = vmatpush1.bf16.msra.mxu0 0
    %1556 = vmatprep.subr.bf16.mxu0 0
    %1557 = vmatpush1.bf16.msra.mxu0 0
    %1558 = vmatprep.subr.bf16.mxu0 0
    %1559 = vmatpush1.bf16.msra.mxu0 0
    %1560 = vmatprep.subr.bf16.mxu0 0
    %1561 = vmatpush1.bf16.msra.mxu0 0
    %1562 = vmatprep.subr.bf16.mxu0 0
    %1563 = vmatpush1.bf16.msra.mxu0 0
    %1564 = vmatprep.mubr.bf16.mxu0 0
    %1565 = vmatmul.mubr.bf16.gmra.mrb[0].mxu0 %v1490
    %v1566 = vpop.f32.mrb[0].mxu0
    %v1567 = vadd.f32 0.0, %v1566
    %v1568 = vpop.f32.mrb[0].mxu0
    %v1569 = vadd.f32 0.0, %v1568
    %v1570 = vpop.f32.mrb[0].mxu0
    %v1571 = vpop.f32.mrb[0].mxu0
    %1572 = vdwg.mxu0
    %v1573 = vadd.f32 %v1141, %v1526
    %v1574 = vadd.f32 %v1143, %v1528
    %v1575 = vadd.f32 %v1182, %v1567
    %v1576 = vadd.f32 %v1184, %v1569
    %v1577 = vxor.u32 %v1573, 2147483648
    %v1578 = vxor.u32 %v1574, 2147483648
    %v1579 = vxor.u32 %v1575, 2147483648
    %v1580 = vmul.f32 %v1577, 1.442695
    %v1581 = vpow.pop %v1580
    %v1582 = vmul.f32 %v1578, 1.442695
    %v1583 = vpow.pop %v1582
    %v1584 = vmul.f32 %v1579, 1.442695
    %v1585 = vpow.pop %v1584
    %v1586 = vadd.f32 %v1581, 1.0
    %v1587 = vadd.f32 %v1583, 1.0
    %v1588 = vadd.f32 %v1585, 1.0
    %v1589 = vrcp.pop %v1586
    %v1590 = vmul.f32 1.0, %v1589
    %v1591 = vrcp.pop %v1587
    %v1592 = vmul.f32 1.0, %v1591
    %v1593 = vrcp.pop %v1588
    %v1594 = vmul.f32 1.0, %v1593
    %v1595 = vtanh.pop %v1576
    %v1596 = vmul.f32 %v1592, %v1487
    %v1597 = vmul.f32 %v1590, %v1595
    %v1598 = vadd.f32 %v1596, %v1597
    %v1599 = vtanh.pop %v1598
    %v1600 = vmul.f32 %v1594, %v1599
    %v1601 = vpack.c.bf16 %v1600, %v1600
    %1602 = vmatprep.subr.bf16.mxu0 %v1317
    %1603 = vmatpush1.bf16.msra.mxu0 %v1316
    %1604 = vmatprep.subr.bf16.mxu0 %v1321
    %1605 = vmatpush1.bf16.msra.mxu0 %v1320
    %1606 = vmatprep.subr.bf16.mxu0 %v1325
    %1607 = vmatpush1.bf16.msra.mxu0 %v1324
    %1608 = vmatprep.subr.bf16.mxu0 %v1329
    %1609 = vmatpush1.bf16.msra.mxu0 %v1328
    %1610 = vmatprep.subr.bf16.mxu0 %v1333
    %1611 = vmatpush1.bf16.msra.mxu0 %v1332
    %1612 = vmatprep.subr.bf16.mxu0 %v1337
    %1613 = vmatpush1.bf16.msra.mxu0 %v1336
    %1614 = vmatprep.subr.bf16.mxu0 %v1341
    %1615 = vmatpush1.bf16.msra.mxu0 %v1340
    %1616 = vmatprep.subr.bf16.mxu0 %v1345
    %1617 = vmatpush1.bf16.msra.mxu0 %v1344
    %1618 = vmatprep.subr.bf16.mxu0 0
    %1619 = vmatpush1.bf16.msra.mxu0 0
    %1620 = vmatprep.subr.bf16.mxu0 0
    %1621 = vmatpush1.bf16.msra.mxu0 0
    %1622 = vmatprep.subr.bf16.mxu0 0
    %1623 = vmatpush1.bf16.msra.mxu0 0
    %1624 = vmatprep.subr.bf16.mxu0 0
    %1625 = vmatpush1.bf16.msra.mxu0 0
    %1626 = vmatprep.subr.bf16.mxu0 0
    %1627 = vmatpush1.bf16.msra.mxu0 0
    %1628 = vmatprep.subr.bf16.mxu0 0
    %1629 = vmatpush1.bf16.msra.mxu0 0
    %1630 = vmatprep.subr.bf16.mxu0 0
    %1631 = vmatpush1.bf16.msra.mxu0 0
    %1632 = vmatprep.subr.bf16.mxu0 0
    %1633 = vmatpush1.bf16.msra.mxu0 0
    %1634 = vmatprep.mubr.bf16.mxu0 0
    %1635 = vmatmul.mubr.bf16.gmra.mrb[0].mxu0 %v1601
    %v1636 = vpop.f32.mrb[0].mxu0
    %v1637 = vadd.f32 0.0, %v1636
    %v1638 = vpop.f32.mrb[0].mxu0
    %v1639 = vadd.f32 0.0, %v1638
    %v1640 = vpop.f32.mrb[0].mxu0
    %v1641 = vpop.f32.mrb[0].mxu0
    %1642 = vdwg.mxu0
    %1643 = vmatprep.subr.bf16.mxu0 %v1319
    %1644 = vmatpush1.bf16.msra.mxu0 %v1318
    %1645 = vmatprep.subr.bf16.mxu0 %v1323
    %1646 = vmatpush1.bf16.msra.mxu0 %v1322
    %1647 = vmatprep.subr.bf16.mxu0 %v1327
    %1648 = vmatpush1.bf16.msra.mxu0 %v1326
    %1649 = vmatprep.subr.bf16.mxu0 %v1331
    %1650 = vmatpush1.bf16.msra.mxu0 %v1330
    %1651 = vmatprep.subr.bf16.mxu0 %v1335
    %1652 = vmatpush1.bf16.msra.mxu0 %v1334
    %1653 = vmatprep.subr.bf16.mxu0 %v1339
    %1654 = vmatpush1.bf16.msra.mxu0 %v1338
    %1655 = vmatprep.subr.bf16.mxu0 %v1343
    %1656 = vmatpush1.bf16.msra.mxu0 %v1342
    %1657 = vmatprep.subr.bf16.mxu0 %v1347
    %1658 = vmatpush1.bf16.msra.mxu0 %v1346
    %1659 = vmatprep.subr.bf16.mxu0 0
    %1660 = vmatpush1.bf16.msra.mxu0 0
    %1661 = vmatprep.subr.bf16.mxu0 0
    %1662 = vmatpush1.bf16.msra.mxu0 0
    %1663 = vmatprep.subr.bf16.mxu0 0
    %1664 = vmatpush1.bf16.msra.mxu0 0
    %1665 = vmatprep.subr.bf16.mxu0 0
    %1666 = vmatpush1.bf16.msra.mxu0 0
    %1667 = vmatprep.subr.bf16.mxu0 0
    %1668 = vmatpush1.bf16.msra.mxu0 0
    %1669 = vmatprep.subr.bf16.mxu0 0
    %1670 = vmatpush1.bf16.msra.mxu0 0
    %1671 = vmatprep.subr.bf16.mxu0 0
    %1672 = vmatpush1.bf16.msra.mxu0 0
    %1673 = vmatprep.subr.bf16.mxu0 0
    %1674 = vmatpush1.bf16.msra.mxu0 0
    %1675 = vmatprep.mubr.bf16.mxu0 0
    %1676 = vmatmul.mubr.bf16.gmra.mrb[0].mxu0 %v1601
    %v1677 = vpop.f32.mrb[0].mxu0
    %v1678 = vadd.f32 0.0, %v1677
    %v1679 = vpop.f32.mrb[0].mxu0
    %v1680 = vadd.f32 0.0, %v1679
    %v1681 = vpop.f32.mrb[0].mxu0
    %v1682 = vpop.f32.mrb[0].mxu0
    %1683 = vdwg.mxu0
    %v1684 = vadd.f32 %v1141, %v1637
    %v1685 = vadd.f32 %v1143, %v1639
    %v1686 = vadd.f32 %v1182, %v1678
    %v1687 = vadd.f32 %v1184, %v1680
    %v1688 = vxor.u32 %v1684, 2147483648
    %v1689 = vxor.u32 %v1685, 2147483648
    %v1690 = vxor.u32 %v1686, 2147483648
    %v1691 = vmul.f32 %v1688, 1.442695
    %v1692 = vpow.pop %v1691
    %v1693 = vmul.f32 %v1689, 1.442695
    %v1694 = vpow.pop %v1693
    %v1695 = vmul.f32 %v1690, 1.442695
    %v1696 = vpow.pop %v1695
    %v1697 = vadd.f32 %v1692, 1.0
    %v1698 = vadd.f32 %v1694, 1.0
    %v1699 = vadd.f32 %v1696, 1.0
    %v1700 = vrcp.pop %v1697
    %v1701 = vmul.f32 1.0, %v1700
    %v1702 = vrcp.pop %v1698
    %v1703 = vmul.f32 1.0, %v1702
    %v1704 = vrcp.pop %v1699
    %v1705 = vmul.f32 1.0, %v1704
    %v1706 = vtanh.pop %v1687
    %v1707 = vmul.f32 %v1703, %v1598
    %v1708 = vmul.f32 %v1701, %v1706
    %v1709 = vadd.f32 %v1707, %v1708
    %v1710 = vtanh.pop %v1709
    %v1711 = vmul.f32 %v1705, %v1710
    %v1712 = vpack.c.bf16 %v1711, %v1711
    %1713 = vmatprep.subr.bf16.mxu0 %v1317
    %1714 = vmatpush1.bf16.msra.mxu0 %v1316
    %1715 = vmatprep.subr.bf16.mxu0 %v1321
    %1716 = vmatpush1.bf16.msra.mxu0 %v1320
    %1717 = vmatprep.subr.bf16.mxu0 %v1325
    %1718 = vmatpush1.bf16.msra.mxu0 %v1324
    %1719 = vmatprep.subr.bf16.mxu0 %v1329
    %1720 = vmatpush1.bf16.msra.mxu0 %v1328
    %1721 = vmatprep.subr.bf16.mxu0 %v1333
    %1722 = vmatpush1.bf16.msra.mxu0 %v1332
    %1723 = vmatprep.subr.bf16.mxu0 %v1337
    %1724 = vmatpush1.bf16.msra.mxu0 %v1336
    %1725 = vmatprep.subr.bf16.mxu0 %v1341
    %1726 = vmatpush1.bf16.msra.mxu0 %v1340
    %1727 = vmatprep.subr.bf16.mxu0 %v1345
    %1728 = vmatpush1.bf16.msra.mxu0 %v1344
    %1729 = vmatprep.subr.bf16.mxu0 0
    %1730 = vmatpush1.bf16.msra.mxu0 0
    %1731 = vmatprep.subr.bf16.mxu0 0
    %1732 = vmatpush1.bf16.msra.mxu0 0
    %1733 = vmatprep.subr.bf16.mxu0 0
    %1734 = vmatpush1.bf16.msra.mxu0 0
    %1735 = vmatprep.subr.bf16.mxu0 0
    %1736 = vmatpush1.bf16.msra.mxu0 0
    %1737 = vmatprep.subr.bf16.mxu0 0
    %1738 = vmatpush1.bf16.msra.mxu0 0
    %1739 = vmatprep.subr.bf16.mxu0 0
    %1740 = vmatpush1.bf16.msra.mxu0 0
    %1741 = vmatprep.subr.bf16.mxu0 0
    %1742 = vmatpush1.bf16.msra.mxu0 0
    %1743 = vmatprep.subr.bf16.mxu0 0
    %1744 = vmatpush1.bf16.msra.mxu0 0
    %1745 = vmatprep.mubr.bf16.mxu0 0
    %1746 = vmatmul.mubr.bf16.gmra.mrb[0].mxu0 %v1712
    %v1747 = vpop.f32.mrb[0].mxu0
    %v1748 = vadd.f32 0.0, %v1747
    %v1749 = vpop.f32.mrb[0].mxu0
    %v1750 = vadd.f32 0.0, %v1749
    %v1751 = vpop.f32.mrb[0].mxu0
    %v1752 = vpop.f32.mrb[0].mxu0
    %1753 = vdwg.mxu0
    %1754 = vmatprep.subr.bf16.mxu0 %v1319
    %1755 = vmatpush1.bf16.msra.mxu0 %v1318
    %1756 = vmatprep.subr.bf16.mxu0 %v1323
    %1757 = vmatpush1.bf16.msra.mxu0 %v1322
    %1758 = vmatprep.subr.bf16.mxu0 %v1327
    %1759 = vmatpush1.bf16.msra.mxu0 %v1326
    %1760 = vmatprep.subr.bf16.mxu0 %v1331
    %1761 = vmatpush1.bf16.msra.mxu0 %v1330
    %1762 = vmatprep.subr.bf16.mxu0 %v1335
    %1763 = vmatpush1.bf16.msra.mxu0 %v1334
    %1764 = vmatprep.subr.bf16.mxu0 %v1339
    %1765 = vmatpush1.bf16.msra.mxu0 %v1338
    %1766 = vmatprep.subr.bf16.mxu0 %v1343
    %1767 = vmatpush1.bf16.msra.mxu0 %v1342
    %1768 = vmatprep.subr.bf16.mxu0 %v1347
    %1769 = vmatpush1.bf16.msra.mxu0 %v1346
    %1770 = vmatprep.subr.bf16.mxu0 0
    %1771 = vmatpush1.bf16.msra.mxu0 0
    %1772 = vmatprep.subr.bf16.mxu0 0
    %1773 = vmatpush1.bf16.msra.mxu0 0
    %1774 = vmatprep.subr.bf16.mxu0 0
    %1775 = vmatpush1.bf16.msra.mxu0 0
    %1776 = vmatprep.subr.bf16.mxu0 0
    %1777 = vmatpush1.bf16.msra.mxu0 0
    %1778 = vmatprep.subr.bf16.mxu0 0
    %1779 = vmatpush1.bf16.msra.mxu0 0
    %1780 = vmatprep.subr.bf16.mxu0 0
    %1781 = vmatpush1.bf16.msra.mxu0 0
    %1782 = vmatprep.subr.bf16.mxu0 0
    %1783 = vmatpush1.bf16.msra.mxu0 0
    %1784 = vmatprep.subr.bf16.mxu0 0
    %1785 = vmatpush1.bf16.msra.mxu0 0
    %1786 = vmatprep.mubr.bf16.mxu0 0
    %1787 = vmatmul.mubr.bf16.gmra.mrb[0].mxu0 %v1712
    %v1788 = vpop.f32.mrb[0].mxu0
    %v1789 = vadd.f32 0.0, %v1788
    %v1790 = vpop.f32.mrb[0].mxu0
    %v1791 = vadd.f32 0.0, %v1790
    %v1792 = vpop.f32.mrb[0].mxu0
    %v1793 = vpop.f32.mrb[0].mxu0
    %1794 = vdwg.mxu0
    %v1795 = vadd.f32 %v1141, %v1748
    %v1796 = vadd.f32 %v1143, %v1750
    %v1797 = vadd.f32 %v1182, %v1789
    %v1798 = vadd.f32 %v1184, %v1791
    %v1799 = vxor.u32 %v1795, 2147483648
    %v1800 = vxor.u32 %v1796, 2147483648
    %v1801 = vxor.u32 %v1797, 2147483648
    %v1802 = vmul.f32 %v1799, 1.442695
    %v1803 = vpow.pop %v1802
    %v1804 = vmul.f32 %v1800, 1.442695
    %v1805 = vpow.pop %v1804
    %v1806 = vmul.f32 %v1801, 1.442695
    %v1807 = vpow.pop %v1806
    %v1808 = vadd.f32 %v1803, 1.0
    %v1809 = vadd.f32 %v1805, 1.0
    %v1810 = vadd.f32 %v1807, 1.0
    %v1811 = vrcp.pop %v1808
    %v1812 = vmul.f32 1.0, %v1811
    %v1813 = vrcp.pop %v1809
    %v1814 = vmul.f32 1.0, %v1813
    %v1815 = vrcp.pop %v1810
    %v1816 = vmul.f32 1.0, %v1815
    %v1817 = vtanh.pop %v1798
    %v1818 = vmul.f32 %v1814, %v1709
    %v1819 = vmul.f32 %v1812, %v1817
    %v1820 = vadd.f32 %v1818, %v1819
    %v1821 = vtanh.pop %v1820
    %v1822 = vmul.f32 %v1816, %v1821
    %v1823 = vpack.c.bf16 %v1822, %v1822
    %1824 = vmatprep.subr.bf16.mxu0 %v1317
    %1825 = vmatpush1.bf16.msra.mxu0 %v1316
    %1826 = vmatprep.subr.bf16.mxu0 %v1321
    %1827 = vmatpush1.bf16.msra.mxu0 %v1320
    %1828 = vmatprep.subr.bf16.mxu0 %v1325
    %1829 = vmatpush1.bf16.msra.mxu0 %v1324
    %1830 = vmatprep.subr.bf16.mxu0 %v1329
    %1831 = vmatpush1.bf16.msra.mxu0 %v1328
    %1832 = vmatprep.subr.bf16.mxu0 %v1333
    %1833 = vmatpush1.bf16.msra.mxu0 %v1332
    %1834 = vmatprep.subr.bf16.mxu0 %v1337
    %1835 = vmatpush1.bf16.msra.mxu0 %v1336
    %1836 = vmatprep.subr.bf16.mxu0 %v1341
    %1837 = vmatpush1.bf16.msra.mxu0 %v1340
    %1838 = vmatprep.subr.bf16.mxu0 %v1345
    %1839 = vmatpush1.bf16.msra.mxu0 %v1344
    %1840 = vmatprep.subr.bf16.mxu0 0
    %1841 = vmatpush1.bf16.msra.mxu0 0
    %1842 = vmatprep.subr.bf16.mxu0 0
    %1843 = vmatpush1.bf16.msra.mxu0 0
    %1844 = vmatprep.subr.bf16.mxu0 0
    %1845 = vmatpush1.bf16.msra.mxu0 0
    %1846 = vmatprep.subr.bf16.mxu0 0
    %1847 = vmatpush1.bf16.msra.mxu0 0
    %1848 = vmatprep.subr.bf16.mxu0 0
    %1849 = vmatpush1.bf16.msra.mxu0 0
    %1850 = vmatprep.subr.bf16.mxu0 0
    %1851 = vmatpush1.bf16.msra.mxu0 0
    %1852 = vmatprep.subr.bf16.mxu0 0
    %1853 = vmatpush1.bf16.msra.mxu0 0
    %1854 = vmatprep.subr.bf16.mxu0 0
    %1855 = vmatpush1.bf16.msra.mxu0 0
    %1856 = vmatprep.mubr.bf16.mxu0 0
    %1857 = vmatmul.mubr.bf16.gmra.mrb[0].mxu0 %v1823
    %v1858 = vpop.f32.mrb[0].mxu0
    %v1859 = vadd.f32 0.0, %v1858
    %v1860 = vpop.f32.mrb[0].mxu0
    %v1861 = vadd.f32 0.0, %v1860
    %v1862 = vpop.f32.mrb[0].mxu0
    %v1863 = vpop.f32.mrb[0].mxu0
    %1864 = vdwg.mxu0
    %1865 = vmatprep.subr.bf16.mxu0 %v1319
    %1866 = vmatpush1.bf16.msra.mxu0 %v1318
    %1867 = vmatprep.subr.bf16.mxu0 %v1323
    %1868 = vmatpush1.bf16.msra.mxu0 %v1322
    %1869 = vmatprep.subr.bf16.mxu0 %v1327
    %1870 = vmatpush1.bf16.msra.mxu0 %v1326
    %1871 = vmatprep.subr.bf16.mxu0 %v1331
    %1872 = vmatpush1.bf16.msra.mxu0 %v1330
    %1873 = vmatprep.subr.bf16.mxu0 %v1335
    %1874 = vmatpush1.bf16.msra.mxu0 %v1334
    %1875 = vmatprep.subr.bf16.mxu0 %v1339
    %1876 = vmatpush1.bf16.msra.mxu0 %v1338
    %1877 = vmatprep.subr.bf16.mxu0 %v1343
    %1878 = vmatpush1.bf16.msra.mxu0 %v1342
    %1879 = vmatprep.subr.bf16.mxu0 %v1347
    %1880 = vmatpush1.bf16.msra.mxu0 %v1346
    %1881 = vmatprep.subr.bf16.mxu0 0
    %1882 = vmatpush1.bf16.msra.mxu0 0
    %1883 = vmatprep.subr.bf16.mxu0 0
    %1884 = vmatpush1.bf16.msra.mxu0 0
    %1885 = vmatprep.subr.bf16.mxu0 0
    %1886 = vmatpush1.bf16.msra.mxu0 0
    %1887 = vmatprep.subr.bf16.mxu0 0
    %1888 = vmatpush1.bf16.msra.mxu0 0
    %1889 = vmatprep.subr.bf16.mxu0 0
    %1890 = vmatpush1.bf16.msra.mxu0 0
    %1891 = vmatprep.subr.bf16.mxu0 0
    %1892 = vmatpush1.bf16.msra.mxu0 0
    %1893 = vmatprep.subr.bf16.mxu0 0
    %1894 = vmatpush1.bf16.msra.mxu0 0
    %1895 = vmatprep.subr.bf16.mxu0 0
    %1896 = vmatpush1.bf16.msra.mxu0 0
    %1897 = vmatprep.mubr.bf16.mxu0 0
    %1898 = vmatmul.mubr.bf16.gmra.mrb[0].mxu0 %v1823
    %v1899 = vpop.f32.mrb[0].mxu0
    %v1900 = vadd.f32 0.0, %v1899
    %v1901 = vpop.f32.mrb[0].mxu0
    %v1902 = vadd.f32 0.0, %v1901
    %v1903 = vpop.f32.mrb[0].mxu0
    %v1904 = vpop.f32.mrb[0].mxu0
    %1905 = vdwg.mxu0
    %v1906 = vadd.f32 %v1141, %v1859
    %v1907 = vadd.f32 %v1143, %v1861
    %v1908 = vadd.f32 %v1182, %v1900
    %v1909 = vadd.f32 %v1184, %v1902
    %v1910 = vxor.u32 %v1906, 2147483648
    %v1911 = vxor.u32 %v1907, 2147483648
    %v1912 = vxor.u32 %v1908, 2147483648
    %v1913 = vmul.f32 %v1910, 1.442695
    %v1914 = vpow.pop %v1913
    %v1915 = vmul.f32 %v1911, 1.442695
    %v1916 = vpow.pop %v1915
    %v1917 = vmul.f32 %v1912, 1.442695
    %v1918 = vpow.pop %v1917
    %v1919 = vadd.f32 %v1914, 1.0
    %v1920 = vadd.f32 %v1916, 1.0
    %v1921 = vadd.f32 %v1918, 1.0
    %v1922 = vrcp.pop %v1919
    %v1923 = vmul.f32 1.0, %v1922
    %v1924 = vrcp.pop %v1920
    %v1925 = vmul.f32 1.0, %v1924
    %v1926 = vrcp.pop %v1921
    %v1927 = vmul.f32 1.0, %v1926
    %v1928 = vtanh.pop %v1909
    %v1929 = vmul.f32 %v1925, %v1820
    %v1930 = vmul.f32 %v1923, %v1928
    %v1931 = vadd.f32 %v1929, %v1930
    %v1932 = vtanh.pop %v1931
    %v1933 = vmul.f32 %v1927, %v1932
    %v1934 = vpack.c.bf16 %v1933, %v1933
    %1935 = vmatprep.subr.bf16.mxu0 %v1317
    %1936 = vmatpush1.bf16.msra.mxu0 %v1316
    %1937 = vmatprep.subr.bf16.mxu0 %v1321
    %1938 = vmatpush1.bf16.msra.mxu0 %v1320
    %1939 = vmatprep.subr.bf16.mxu0 %v1325
    %1940 = vmatpush1.bf16.msra.mxu0 %v1324
    %1941 = vmatprep.subr.bf16.mxu0 %v1329
    %1942 = vmatpush1.bf16.msra.mxu0 %v1328
    %1943 = vmatprep.subr.bf16.mxu0 %v1333
    %1944 = vmatpush1.bf16.msra.mxu0 %v1332
    %1945 = vmatprep.subr.bf16.mxu0 %v1337
    %1946 = vmatpush1.bf16.msra.mxu0 %v1336
    %1947 = vmatprep.subr.bf16.mxu0 %v1341
    %1948 = vmatpush1.bf16.msra.mxu0 %v1340
    %1949 = vmatprep.subr.bf16.mxu0 %v1345
    %1950 = vmatpush1.bf16.msra.mxu0 %v1344
    %1951 = vmatprep.subr.bf16.mxu0 0
    %1952 = vmatpush1.bf16.msra.mxu0 0
    %1953 = vmatprep.subr.bf16.mxu0 0
    %1954 = vmatpush1.bf16.msra.mxu0 0
    %1955 = vmatprep.subr.bf16.mxu0 0
    %1956 = vmatpush1.bf16.msra.mxu0 0
    %1957 = vmatprep.subr.bf16.mxu0 0
    %1958 = vmatpush1.bf16.msra.mxu0 0
    %1959 = vmatprep.subr.bf16.mxu0 0
    %1960 = vmatpush1.bf16.msra.mxu0 0
    %1961 = vmatprep.subr.bf16.mxu0 0
    %1962 = vmatpush1.bf16.msra.mxu0 0
    %1963 = vmatprep.subr.bf16.mxu0 0
    %1964 = vmatpush1.bf16.msra.mxu0 0
    %1965 = vmatprep.subr.bf16.mxu0 0
    %1966 = vmatpush1.bf16.msra.mxu0 0
    %1967 = vmatprep.mubr.bf16.mxu0 0
    %1968 = vmatmul.mubr.bf16.gmra.mrb[0].mxu0 %v1934
    %v1969 = vpop.f32.mrb[0].mxu0
    %v1970 = vadd.f32 0.0, %v1969
    %v1971 = vpop.f32.mrb[0].mxu0
    %v1972 = vadd.f32 0.0, %v1971
    %v1973 = vpop.f32.mrb[0].mxu0
    %v1974 = vpop.f32.mrb[0].mxu0
    %1975 = vdwg.mxu0
    %1976 = vmatprep.subr.bf16.mxu0 %v1319
    %1977 = vmatpush1.bf16.msra.mxu0 %v1318
    %1978 = vmatprep.subr.bf16.mxu0 %v1323
    %1979 = vmatpush1.bf16.msra.mxu0 %v1322
    %1980 = vmatprep.subr.bf16.mxu0 %v1327
    %1981 = vmatpush1.bf16.msra.mxu0 %v1326
    %1982 = vmatprep.subr.bf16.mxu0 %v1331
    %1983 = vmatpush1.bf16.msra.mxu0 %v1330
    %1984 = vmatprep.subr.bf16.mxu0 %v1335
    %1985 = vmatpush1.bf16.msra.mxu0 %v1334
    %1986 = vmatprep.subr.bf16.mxu0 %v1339
    %1987 = vmatpush1.bf16.msra.mxu0 %v1338
    %1988 = vmatprep.subr.bf16.mxu0 %v1343
    %1989 = vmatpush1.bf16.msra.mxu0 %v1342
    %1990 = vmatprep.subr.bf16.mxu0 %v1347
    %1991 = vmatpush1.bf16.msra.mxu0 %v1346
    %1992 = vmatprep.subr.bf16.mxu0 0
    %1993 = vmatpush1.bf16.msra.mxu0 0
    %1994 = vmatprep.subr.bf16.mxu0 0
    %1995 = vmatpush1.bf16.msra.mxu0 0
    %1996 = vmatprep.subr.bf16.mxu0 0
    %1997 = vmatpush1.bf16.msra.mxu0 0
    %1998 = vmatprep.subr.bf16.mxu0 0
    %1999 = vmatpush1.bf16.msra.mxu0 0
    %2000 = vmatprep.subr.bf16.mxu0 0
    %2001 = vmatpush1.bf16.msra.mxu0 0
    %2002 = vmatprep.subr.bf16.mxu0 0
    %2003 = vmatpush1.bf16.msra.mxu0 0
    %2004 = vmatprep.subr.bf16.mxu0 0
    %2005 = vmatpush1.bf16.msra.mxu0 0
    %2006 = vmatprep.subr.bf16.mxu0 0
    %2007 = vmatpush1.bf16.msra.mxu0 0
    %2008 = vmatprep.mubr.bf16.mxu0 0
    %2009 = vmatmul.mubr.bf16.gmra.mrb[0].mxu0 %v1934
    %v2010 = vpop.f32.mrb[0].mxu0
    %v2011 = vadd.f32 0.0, %v2010
    %v2012 = vpop.f32.mrb[0].mxu0
    %v2013 = vadd.f32 0.0, %v2012
    %v2014 = vpop.f32.mrb[0].mxu0
    %v2015 = vpop.f32.mrb[0].mxu0
    %2016 = vdwg.mxu0
    %v2017 = vadd.f32 %v1141, %v1970
    %v2018 = vadd.f32 %v1143, %v1972
    %v2019 = vadd.f32 %v1182, %v2011
    %v2020 = vadd.f32 %v1184, %v2013
    %v2021 = vxor.u32 %v2017, 2147483648
    %v2022 = vxor.u32 %v2018, 2147483648
    %v2023 = vxor.u32 %v2019, 2147483648
    %v2024 = vmul.f32 %v2021, 1.442695
    %v2025 = vpow.pop %v2024
    %v2026 = vmul.f32 %v2022, 1.442695
    %v2027 = vpow.pop %v2026
    %v2028 = vmul.f32 %v2023, 1.442695
    %v2029 = vpow.pop %v2028
    %v2030 = vadd.f32 %v2025, 1.0
    %v2031 = vadd.f32 %v2027, 1.0
    %v2032 = vadd.f32 %v2029, 1.0
    %v2033 = vrcp.pop %v2030
    %v2034 = vmul.f32 1.0, %v2033
    %v2035 = vrcp.pop %v2031
    %v2036 = vmul.f32 1.0, %v2035
    %v2037 = vrcp.pop %v2032
    %v2038 = vmul.f32 1.0, %v2037
    %v2039 = vtanh.pop %v2020
    %v2040 = vmul.f32 %v2036, %v1931
    %v2041 = vmul.f32 %v2034, %v2039
    %v2042 = vadd.f32 %v2040, %v2041
    %v2043 = vtanh.pop %v2042
    %v2044 = vmul.f32 %v2038, %v2043
    %v2045 = vpack.c.bf16 %v2044, %v2044
    %2046 = vmatprep.subr.bf16.mxu0 %v1317
    %2047 = vmatpush1.bf16.msra.mxu0 %v1316
    %2048 = vmatprep.subr.bf16.mxu0 %v1321
    %2049 = vmatpush1.bf16.msra.mxu0 %v1320
    %2050 = vmatprep.subr.bf16.mxu0 %v1325
    %2051 = vmatpush1.bf16.msra.mxu0 %v1324
    %2052 = vmatprep.subr.bf16.mxu0 %v1329
    %2053 = vmatpush1.bf16.msra.mxu0 %v1328
    %2054 = vmatprep.subr.bf16.mxu0 %v1333
    %2055 = vmatpush1.bf16.msra.mxu0 %v1332
    %2056 = vmatprep.subr.bf16.mxu0 %v1337
    %2057 = vmatpush1.bf16.msra.mxu0 %v1336
    %2058 = vmatprep.subr.bf16.mxu0 %v1341
    %2059 = vmatpush1.bf16.msra.mxu0 %v1340
    %2060 = vmatprep.subr.bf16.mxu0 %v1345
    %2061 = vmatpush1.bf16.msra.mxu0 %v1344
    %2062 = vmatprep.subr.bf16.mxu0 0
    %2063 = vmatpush1.bf16.msra.mxu0 0
    %2064 = vmatprep.subr.bf16.mxu0 0
    %2065 = vmatpush1.bf16.msra.mxu0 0
    %2066 = vmatprep.subr.bf16.mxu0 0
    %2067 = vmatpush1.bf16.msra.mxu0 0
    %2068 = vmatprep.subr.bf16.mxu0 0
    %2069 = vmatpush1.bf16.msra.mxu0 0
    %2070 = vmatprep.subr.bf16.mxu0 0
    %2071 = vmatpush1.bf16.msra.mxu0 0
    %2072 = vmatprep.subr.bf16.mxu0 0
    %2073 = vmatpush1.bf16.msra.mxu0 0
    %2074 = vmatprep.subr.bf16.mxu0 0
    %2075 = vmatpush1.bf16.msra.mxu0 0
    %2076 = vmatprep.subr.bf16.mxu0 0
    %2077 = vmatpush1.bf16.msra.mxu0 0
    %2078 = vmatprep.mubr.bf16.mxu0 0
    %2079 = vmatmul.mubr.bf16.gmra.mrb[0].mxu0 %v2045
    %v2080 = vpop.f32.mrb[0].mxu0
    %v2081 = vadd.f32 0.0, %v2080
    %v2082 = vpop.f32.mrb[0].mxu0
    %v2083 = vadd.f32 0.0, %v2082
    %v2084 = vpop.f32.mrb[0].mxu0
    %v2085 = vpop.f32.mrb[0].mxu0
    %2086 = vdwg.mxu0
    %2087 = vmatprep.subr.bf16.mxu0 %v1319
    %2088 = vmatpush1.bf16.msra.mxu0 %v1318
    %2089 = vmatprep.subr.bf16.mxu0 %v1323
    %2090 = vmatpush1.bf16.msra.mxu0 %v1322
    %2091 = vmatprep.subr.bf16.mxu0 %v1327
    %2092 = vmatpush1.bf16.msra.mxu0 %v1326
    %2093 = vmatprep.subr.bf16.mxu0 %v1331
    %2094 = vmatpush1.bf16.msra.mxu0 %v1330
    %2095 = vmatprep.subr.bf16.mxu0 %v1335
    %2096 = vmatpush1.bf16.msra.mxu0 %v1334
    %2097 = vmatprep.subr.bf16.mxu0 %v1339
    %2098 = vmatpush1.bf16.msra.mxu0 %v1338
    %2099 = vmatprep.subr.bf16.mxu0 %v1343
    %2100 = vmatpush1.bf16.msra.mxu0 %v1342
    %2101 = vmatprep.subr.bf16.mxu0 %v1347
    %2102 = vmatpush1.bf16.msra.mxu0 %v1346
    %2103 = vmatprep.subr.bf16.mxu0 0
    %2104 = vmatpush1.bf16.msra.mxu0 0
    %2105 = vmatprep.subr.bf16.mxu0 0
    %2106 = vmatpush1.bf16.msra.mxu0 0
    %2107 = vmatprep.subr.bf16.mxu0 0
    %2108 = vmatpush1.bf16.msra.mxu0 0
    %2109 = vmatprep.subr.bf16.mxu0 0
    %2110 = vmatpush1.bf16.msra.mxu0 0
    %2111 = vmatprep.subr.bf16.mxu0 0
    %2112 = vmatpush1.bf16.msra.mxu0 0
    %2113 = vmatprep.subr.bf16.mxu0 0
    %2114 = vmatpush1.bf16.msra.mxu0 0
    %2115 = vmatprep.subr.bf16.mxu0 0
    %2116 = vmatpush1.bf16.msra.mxu0 0
    %2117 = vmatprep.subr.bf16.mxu0 0
    %2118 = vmatpush1.bf16.msra.mxu0 0
    %2119 = vmatprep.mubr.bf16.mxu0 0
    %2120 = vmatmul.mubr.bf16.gmra.mrb[0].mxu0 %v2045
    %v2121 = vpop.f32.mrb[0].mxu0
    %v2122 = vadd.f32 0.0, %v2121
    %v2123 = vpop.f32.mrb[0].mxu0
    %v2124 = vadd.f32 0.0, %v2123
    %v2125 = vpop.f32.mrb[0].mxu0
    %v2126 = vpop.f32.mrb[0].mxu0
    %2127 = vdwg.mxu0
    %v2128 = vadd.f32 %v1141, %v2081
    %v2129 = vadd.f32 %v1143, %v2083
    %v2130 = vadd.f32 %v1182, %v2122
    %v2131 = vadd.f32 %v1184, %v2124
    %v2132 = vxor.u32 %v2128, 2147483648
    %v2133 = vxor.u32 %v2129, 2147483648
    %v2134 = vxor.u32 %v2130, 2147483648
    %v2135 = vmul.f32 %v2132, 1.442695
    %v2136 = vpow.pop %v2135
    %v2137 = vmul.f32 %v2133, 1.442695
    %v2138 = vpow.pop %v2137
    %v2139 = vmul.f32 %v2134, 1.442695
    %v2140 = vpow.pop %v2139
    %v2141 = vadd.f32 %v2136, 1.0
    %v2142 = vadd.f32 %v2138, 1.0
    %v2143 = vadd.f32 %v2140, 1.0
    %v2144 = vrcp.pop %v2141
    %v2145 = vmul.f32 1.0, %v2144
    %v2146 = vrcp.pop %v2142
    %v2147 = vmul.f32 1.0, %v2146
    %v2148 = vrcp.pop %v2143
    %v2149 = vmul.f32 1.0, %v2148
    %v2150 = vtanh.pop %v2131
    %v2151 = vmul.f32 %v2147, %v2042
    %v2152 = vmul.f32 %v2145, %v2150
    %v2153 = vadd.f32 %v2151, %v2152
    %v2154 = vtanh.pop %v2153
    %v2155 = vmul.f32 %v2149, %v2154
    %v2156 = vpack.c.bf16 %v2155, %v2155
    %2157 = vmatprep.subr.bf16.mxu0 %v1317
    %2158 = vmatpush1.bf16.msra.mxu0 %v1316
    %2159 = vmatprep.subr.bf16.mxu0 %v1321
    %2160 = vmatpush1.bf16.msra.mxu0 %v1320
    %2161 = vmatprep.subr.bf16.mxu0 %v1325
    %2162 = vmatpush1.bf16.msra.mxu0 %v1324
    %2163 = vmatprep.subr.bf16.mxu0 %v1329
    %2164 = vmatpush1.bf16.msra.mxu0 %v1328
    %2165 = vmatprep.subr.bf16.mxu0 %v1333
    %2166 = vmatpush1.bf16.msra.mxu0 %v1332
    %2167 = vmatprep.subr.bf16.mxu0 %v1337
    %2168 = vmatpush1.bf16.msra.mxu0 %v1336
    %2169 = vmatprep.subr.bf16.mxu0 %v1341
    %2170 = vmatpush1.bf16.msra.mxu0 %v1340
    %2171 = vmatprep.subr.bf16.mxu0 %v1345
    %2172 = vmatpush1.bf16.msra.mxu0 %v1344
    %2173 = vmatprep.subr.bf16.mxu0 0
    %2174 = vmatpush1.bf16.msra.mxu0 0
    %2175 = vmatprep.subr.bf16.mxu0 0
    %2176 = vmatpush1.bf16.msra.mxu0 0
    %2177 = vmatprep.subr.bf16.mxu0 0
    %2178 = vmatpush1.bf16.msra.mxu0 0
    %2179 = vmatprep.subr.bf16.mxu0 0
    %2180 = vmatpush1.bf16.msra.mxu0 0
    %2181 = vmatprep.subr.bf16.mxu0 0
    %2182 = vmatpush1.bf16.msra.mxu0 0
    %2183 = vmatprep.subr.bf16.mxu0 0
    %2184 = vmatpush1.bf16.msra.mxu0 0
    %2185 = vmatprep.subr.bf16.mxu0 0
    %2186 = vmatpush1.bf16.msra.mxu0 0
    %2187 = vmatprep.subr.bf16.mxu0 0
    %2188 = vmatpush1.bf16.msra.mxu0 0
    %2189 = vmatprep.mubr.bf16.mxu0 0
    %2190 = vmatmul.mubr.bf16.gmra.mrb[0].mxu0 %v2156
    %v2191 = vpop.f32.mrb[0].mxu0
    %v2192 = vadd.f32 0.0, %v2191
    %v2193 = vpop.f32.mrb[0].mxu0
    %v2194 = vadd.f32 0.0, %v2193
    %v2195 = vpop.f32.mrb[0].mxu0
    %v2196 = vpop.f32.mrb[0].mxu0
    %2197 = vdwg.mxu0
    %2198 = vmatprep.subr.bf16.mxu0 %v1319
    %2199 = vmatpush1.bf16.msra.mxu0 %v1318
    %2200 = vmatprep.subr.bf16.mxu0 %v1323
    %2201 = vmatpush1.bf16.msra.mxu0 %v1322
    %2202 = vmatprep.subr.bf16.mxu0 %v1327
    %2203 = vmatpush1.bf16.msra.mxu0 %v1326
    %2204 = vmatprep.subr.bf16.mxu0 %v1331
    %2205 = vmatpush1.bf16.msra.mxu0 %v1330
    %2206 = vmatprep.subr.bf16.mxu0 %v1335
    %2207 = vmatpush1.bf16.msra.mxu0 %v1334
    %2208 = vmatprep.subr.bf16.mxu0 %v1339
    %2209 = vmatpush1.bf16.msra.mxu0 %v1338
    %2210 = vmatprep.subr.bf16.mxu0 %v1343
    %2211 = vmatpush1.bf16.msra.mxu0 %v1342
    %2212 = vmatprep.subr.bf16.mxu0 %v1347
    %2213 = vmatpush1.bf16.msra.mxu0 %v1346
    %2214 = vmatprep.subr.bf16.mxu0 0
    %2215 = vmatpush1.bf16.msra.mxu0 0
    %2216 = vmatprep.subr.bf16.mxu0 0
    %2217 = vmatpush1.bf16.msra.mxu0 0
    %2218 = vmatprep.subr.bf16.mxu0 0
    %2219 = vmatpush1.bf16.msra.mxu0 0
    %2220 = vmatprep.subr.bf16.mxu0 0
    %2221 = vmatpush1.bf16.msra.mxu0 0
    %2222 = vmatprep.subr.bf16.mxu0 0
    %2223 = vmatpush1.bf16.msra.mxu0 0
    %2224 = vmatprep.subr.bf16.mxu0 0
    %2225 = vmatpush1.bf16.msra.mxu0 0
    %2226 = vmatprep.subr.bf16.mxu0 0
    %2227 = vmatpush1.bf16.msra.mxu0 0
    %2228 = vmatprep.subr.bf16.mxu0 0
    %2229 = vmatpush1.bf16.msra.mxu0 0
    %2230 = vmatprep.mubr.bf16.mxu0 0
    %2231 = vmatmul.mubr.bf16.gmra.mrb[0].mxu0 %v2156
    %v2232 = vpop.f32.mrb[0].mxu0
    %v2233 = vadd.f32 0.0, %v2232
    %v2234 = vpop.f32.mrb[0].mxu0
    %v2235 = vadd.f32 0.0, %v2234
    %v2236 = vpop.f32.mrb[0].mxu0
    %v2237 = vpop.f32.mrb[0].mxu0
    %2238 = vdwg.mxu0
    %v2239 = vadd.f32 %v1141, %v2192
    %v2240 = vadd.f32 %v1143, %v2194
    %v2241 = vadd.f32 %v1182, %v2233
    %v2242 = vadd.f32 %v1184, %v2235
    %v2243 = vxor.u32 %v2239, 2147483648
    %v2244 = vxor.u32 %v2240, 2147483648
    %v2245 = vxor.u32 %v2241, 2147483648
    %v2246 = vmul.f32 %v2243, 1.442695
    %v2247 = vpow.pop %v2246
    %v2248 = vmul.f32 %v2244, 1.442695
    %v2249 = vpow.pop %v2248
    %v2250 = vmul.f32 %v2245, 1.442695
    %v2251 = vpow.pop %v2250
    %v2252 = vadd.f32 %v2247, 1.0
    %v2253 = vadd.f32 %v2249, 1.0
    %v2254 = vadd.f32 %v2251, 1.0
    %v2255 = vrcp.pop %v2252
    %v2256 = vmul.f32 1.0, %v2255
    %v2257 = vrcp.pop %v2253
    %v2258 = vmul.f32 1.0, %v2257
    %v2259 = vrcp.pop %v2254
    %v2260 = vmul.f32 1.0, %v2259
    %v2261 = vtanh.pop %v2242
    %v2262 = vmul.f32 %v2258, %v2153
    %v2263 = vmul.f32 %v2256, %v2261
    %v2264 = vadd.f32 %v2262, %v2263
    %v2265 = vtanh.pop %v2264
    %v2266 = vmul.f32 %v2260, %v2265
    %v2268 = vrot.slane %v1600, 6
    %v2271 = vrot.slane %v1711, 4
    %v2274 = vrot.slane %v1822, 2
    %v2277 = vrot.slane %v2044, 6
    %v2280 = vrot.slane %v2155, 4
    %v2283 = vrot.slane %v2266, 2
    %vm2285 = vcmask 1041408
    %v2286 = vsel %vm2285, %v1489, %v2268
    %vm2287 = vcmask 1043456
    %v2288 = vsel %vm2287, %v2286, %v2271
    %vm2289 = vcmask 1045504
    %v2290 = vsel %vm2289, %v2288, %v2274
    %v2291 = vsel %vm2285, %v1933, %v2277
    %v2292 = vsel %vm2287, %v2291, %v2280
    %v2293 = vsel %vm2289, %v2292, %v2283
    %v2294 = vmul.f32 %v2290, 0.1
    %v2295 = vmul.f32 %v2293, 0.1
    %v2296 = vmax.f32 %v2290, %v2294
    %v2297 = vmax.f32 %v2293, %v2295
    %v2298 = vpack.c.bf16 %v2297, %v2296
    %v2299 = vld [vmem:[%s10] sm:$0xf]
    %v2300 = vld [vmem:[%s10 + $0x4] sm:$0xf]
    %v2301 = vld [vmem:[%s10 + $0x8] sm:$0xf]
    %v2302 = vld [vmem:[%s10 + $0xc] sm:$0xf]
    %v2303 = vld [vmem:[%s10 + $0x10] sm:$0xf]
    %v2304 = vld [vmem:[%s10 + $0x14] sm:$0xf]
    %v2305 = vld [vmem:[%s10 + $0x18] sm:$0xf]
    %v2306 = vld [vmem:[%s10 + $0x1c] sm:$0xf]
    %v2307 = vld [vmem:[%s10 + $0x20] sm:$0xf]
    %v2308 = vld [vmem:[%s10 + $0x24] sm:$0xf]
    %v2309 = vld [vmem:[%s10 + $0x28] sm:$0xf]
    %v2310 = vld [vmem:[%s10 + $0x2c] sm:$0xf]
    %v2311 = vld [vmem:[%s10 + $0x30] sm:$0xf]
    %v2312 = vld [vmem:[%s10 + $0x34] sm:$0xf]
    %v2313 = vld [vmem:[%s10 + $0x38] sm:$0xf]
    %v2314 = vld [vmem:[%s10 + $0x3c] sm:$0xf]
    %v2315 = vld [vmem:[%s1] sm:$0xff]
    %v2316 = vld [vmem:[%s1 + $0x8] sm:$0xff]
    %v2333 = vunpack.c.l.b16 %v2299
    %v2334 = vunpack.c.l.b16 %v2300
    %v2335 = vunpack.c.l.b16 %v2301
    %v2336 = vunpack.c.l.b16 %v2302
    %v2337 = vunpack.c.l.b16 %v2303
    %v2338 = vunpack.c.l.b16 %v2304
    %v2339 = vunpack.c.l.b16 %v2305
    %v2340 = vunpack.c.l.b16 %v2306
    %v2341 = vunpack.c.l.b16 %v2307
    %v2342 = vunpack.c.l.b16 %v2308
    %v2343 = vunpack.c.l.b16 %v2309
    %v2344 = vunpack.c.l.b16 %v2310
    %v2345 = vunpack.c.l.b16 %v2311
    %v2346 = vunpack.c.l.b16 %v2312
    %v2347 = vunpack.c.l.b16 %v2313
    %v2348 = vunpack.c.l.b16 %v2314
    %v2349 = vpack.c.b16 %v2334, %v2333
    %v2350 = vpack.c.b16 %v2336, %v2335
    %v2351 = vpack.c.b16 %v2338, %v2337
    %v2352 = vpack.c.b16 %v2340, %v2339
    %v2353 = vpack.c.b16 %v2342, %v2341
    %v2354 = vpack.c.b16 %v2344, %v2343
    %v2355 = vpack.c.b16 %v2346, %v2345
    %v2356 = vpack.c.b16 %v2348, %v2347
    %2365 = vmatprep.subr.bf16.mxu0 0
    %2366 = vmatpush1.bf16.msra.mxu0 %v2349
    %2367 = vmatprep.subr.bf16.mxu0 0
    %2368 = vmatpush1.bf16.msra.mxu0 %v2350
    %2369 = vmatprep.subr.bf16.mxu0 0
    %2370 = vmatpush1.bf16.msra.mxu0 %v2351
    %2371 = vmatprep.subr.bf16.mxu0 0
    %2372 = vmatpush1.bf16.msra.mxu0 %v2352
    %2373 = vmatprep.subr.bf16.mxu0 0
    %2374 = vmatpush1.bf16.msra.mxu0 %v2353
    %2375 = vmatprep.subr.bf16.mxu0 0
    %2376 = vmatpush1.bf16.msra.mxu0 %v2354
    %2377 = vmatprep.subr.bf16.mxu0 0
    %2378 = vmatpush1.bf16.msra.mxu0 %v2355
    %2379 = vmatprep.subr.bf16.mxu0 0
    %2380 = vmatpush1.bf16.msra.mxu0 %v2356
    %2381 = vmatprep.subr.bf16.mxu0 0
    %2382 = vmatpush1.bf16.msra.mxu0 0
    %2383 = vmatprep.subr.bf16.mxu0 0
    %2384 = vmatpush1.bf16.msra.mxu0 0
    %2385 = vmatprep.subr.bf16.mxu0 0
    %2386 = vmatpush1.bf16.msra.mxu0 0
    %2387 = vmatprep.subr.bf16.mxu0 0
    %2388 = vmatpush1.bf16.msra.mxu0 0
    %2389 = vmatprep.subr.bf16.mxu0 0
    %2390 = vmatpush1.bf16.msra.mxu0 0
    %2391 = vmatprep.subr.bf16.mxu0 0
    %2392 = vmatpush1.bf16.msra.mxu0 0
    %2393 = vmatprep.subr.bf16.mxu0 0
    %2394 = vmatpush1.bf16.msra.mxu0 0
    %2395 = vmatprep.subr.bf16.mxu0 0
    %2396 = vmatpush1.bf16.msra.mxu0 0
    %2397 = vmatprep.mubr.bf16.mxu0 0
    %2398 = vmatmul.mubr.bf16.gmra.mrb[0].mxu0 %v2298
    %v2399 = vpop.f32.mrb[0].mxu0
    %v2400 = vadd.f32 %v2315, %v2399
    %v2401 = vpop.f32.mrb[0].mxu0
    %v2402 = vpop.f32.mrb[0].mxu0
    %v2403 = vadd.f32 %v2316, %v2402
    %v2404 = vpop.f32.mrb[0].mxu0
    %2405 = vdwg.mxu0
    %vm2406 = vcmask 15360
    %2407 = vst.msk [vmem:[%s11] sm:$0xff] %vm2406, %v2400
    %2408 = vst.msk [vmem:[%s11 + $0x8] sm:$0xff] %vm2406, %v2403
    // Predicated region
    $region58: #{vlstm_f_forward.1} parent=1 // pred_check
      _
    $region59: #{vlstm_f_forward.1} parent=1 // pred_check_branch
      %2410 = sbr.rel (0) target = $region61
    $region60: #{vlstm_f_forward.1} parent=1 // pred_region
      _
    $region61: #{vlstm_f_forward.1} parent=1 // pred_fallthru
      _
    // Predicated region
    $region62: #{vlstm_f_forward.1} parent=1 // pred_check
      _
    $region63: #{vlstm_f_forward.1} parent=1 // pred_check_branch
      %2412 = sbr.rel (0) target = $region65
    $region64: #{vlstm_f_forward.1} parent=1 // pred_region
      _
    $region65: #{vlstm_f_forward.1} parent=1 // pred_fallthru
      _
    %2413 = vsyncpa [#allocation3], 1
    %2414 = vsyncpa [#allocation5], 1

</llo_original>
